<compile_context>
chip_gen: v5e
topology: v5e:2x2
jax: 0.10.0
libtpu: 0.0.40
codegen_flags: <defaults>
</compile_context>

<pallas_src>
import functools

import jax
import jax.numpy as jnp
from jax import lax
from jax.experimental import pallas as pl
from jax.experimental.pallas import tpu as pltpu


def _round_up(x, m):
    return (x + m - 1) // m * m


def _select_tiles(n_total, d_pad, itemsize):
    """Pick (tm, tn, n_pad, vmem_limit_bytes) from a VMEM footprint estimate."""
    def footprint(tm, tn):
        feat = 2 * (tm + tn) * d_pad * itemsize      # double-buffered anchor / contrast tiles
        work = 4 * tm * tn * 4                       # s / p / pos / select f32 temporaries
        small = 24 * tm * 4 + 8 * tn * 4             # labels, 1/msum, selfdot, scratch, out
        return feat + work + small

    # Conservative selection budget so the <=48 MiB scoped-VMEM limit (safe on v7x's
    # 64 MiB physical VMEM; plenty of headroom on v5e/v6e's 128 MiB) is never tight.
    budget = 24 << 20
    tm = 128
    for cand in (512, 256):
        if _round_up(n_total, cand) // cand < 2:
            # Keep >= 2 row blocks: the "parallel" row axis is what shards across the
            # two TensorCores on v7x; one giant row block would idle a whole core.
            continue
        if footprint(cand, 256) <= budget:
            tm = cand
            break
    tn = 256 if tm >= 256 else 128
    # TODO(synk): for very large feature dims whose f32 footprint exceeds the budget
    # even at tm=128, the feature axis should additionally be tiled as a third
    # (reduction) grid axis.
    n_pad = _round_up(n_total, max(tm, tn))
    vmem_limit = int(min(48 << 20, max(32 << 20, 2 * footprint(tm, tn))))
    return tm, tn, n_pad, vmem_limit


def _supcon_kernel(lab_r_ref, lab_c_ref, minv_ref, sd_ref, a_r_ref, a_c_ref, out_ref,
                   m_sc, l_sc, ms_sc, *, inv_temp, loss_scale, n_valid, n_pad, tm, tn):
    i = pl.program_id(0)          # anchor row block      -- "parallel"
    j = pl.program_id(1)          # contrast column block -- reduction, "arbitrary"

    @pl.when(j == 0)
    def _():
        m_sc[...] = jnp.full_like(m_sc, -1e30)    # finite "-inf" avoids inf-inf NaNs
        l_sc[...] = jnp.zeros_like(l_sc)
        ms_sc[...] = jnp.zeros_like(ms_sc)

    # logits tile: (A_i . A_j^T) / T -- trans-B dot_general (contract last dims of
    # both), f32 MXU accumulation.  No pre-transposed [D, N] contrast copy needed.
    s = lax.dot_general(
        a_r_ref[...], a_c_ref[...],
        dimension_numbers=(((1,), (1,)), ((), ())),
        preferred_element_type=jnp.float32) * inv_temp                # [tm, tn] f32

    # Positive-pair mask straight from the (tm,1)/(1,tn) label vectors.  Padded
    # columns carry label -1 (never equal to a remapped valid label), so no padding
    # mask is needed here; the self pair (diagonal) IS matched and is removed via the
    # precomputed self-similarity sd_ref below -> no [tm,tn] iota / diagonal-compare
    # work on the N^2 hot path.
    pos = lab_r_ref[...] == lab_c_ref[...]                            # [tm, tn] bool

    # Online softmax over the row (denominator of log_prob).
    m_prev = m_sc[...]
    m_new = jnp.maximum(m_prev, jnp.max(s, axis=1, keepdims=True))    # [tm, 1]
    alpha = jnp.exp(m_prev - m_new)
    p = jnp.exp(s - m_new)                                            # the N^2 exp hot path
    if n_pad != n_valid:   # static: compiled in only when padded columns exist
        col_ok = (j * tn + lax.broadcasted_iota(jnp.int32, (1, tn), 1)) < n_valid
        p = jnp.where(col_ok, p, 0.0)
    row_sum = jnp.sum(p, axis=1, keepdims=True)

    # Self-contrast exclusion: subtract exp(s_ii - m) only for rows whose diagonal
    # element lies in this column block ([tm,1] work only, no [tm,tn] mask).
    rrow = i * tm + lax.broadcasted_iota(jnp.int32, (tm, 1), 0)       # global row ids
    diag_here = jnp.logical_and(rrow >= j * tn, rrow < (j + 1) * tn)
    row_sum = row_sum - jnp.where(diag_here, jnp.exp(sd_ref[...] - m_new), 0.0)

    l_sc[...] = alpha * l_sc[...] + row_sum
    m_sc[...] = m_new

    # Positive-logit sum (self included here; removed once in the finalize).
    ms_sc[...] += jnp.sum(jnp.where(pos, s, 0.0), axis=1, keepdims=True)

    @pl.when(j == pl.num_programs(1) - 1)
    def _():
        # Guard against exact cancellation of the self term on degenerate inputs
        # (where the reference itself would be ~log(denormal)).
        l = jnp.maximum(l_sc[...], 1e-37)
        logsumexp = m_sc[...] + jnp.log(l)                            # [tm, 1]
        # sum(mask*log_prob)/mask_sum == (sum(mask*s) - s_ii) / |P| - logsumexp
        mean_lpp = (ms_sc[...] - sd_ref[...]) * minv_ref[...] - logsumexp
        loss_rows = loss_scale * mean_lpp                             # -(T/base_T) * mlpp
        loss_rows = jnp.where(rrow < n_valid, loss_rows, 0.0)         # zero padded anchors
        # TODO(synk): a lane-major (1,1,tm) output block would avoid the masked
        # partial store; written once per row block, so the win is negligible.
        out_ref[...] = loss_rows.reshape(1, tm, 1)


def supcon_loss(features, labels=None, *, temperature=0.1, base_temperature=0.07,
                contrast_mode="all", matmul_dtype=jnp.bfloat16):
    """Pallas TPU implementation of SupConLoss.forward (contrast_mode='all').

    matmul_dtype=bfloat16 (default) runs the MXU at its native bf16 rate and halves
    the contrast-tile HBM stream; logits are perturbed by O(|logit| * 2^-8), i.e. a
    few 1e-2 at temperature ~0.1 -- in the noise for a training loss.  Pass
    matmul_dtype=jnp.float32 for tight numerical parity with the PyTorch reference.
    """
    if features.ndim < 3:
        raise ValueError("`features` needs to be [bsz, n_views, ...]")
    if features.ndim > 3:
        features = features.reshape(features.shape[0], features.shape[1], -1)
    if contrast_mode != "all":
        # TODO(synk): contrast_mode='one' (anchor = first view only) not implemented.
        raise ValueError("only contrast_mode='all' is implemented")

    bsz, n_views, dim = features.shape
    n_total = bsz * n_views

    # contrast_feature = cat(unbind(features, dim=1), dim=0) -> view-major [N, D],
    # relayouted directly in the matmul dtype (no f32 intermediate copy).
    cf = jnp.transpose(features.astype(matmul_dtype), (1, 0, 2)).reshape(n_total, dim)

    # Labels remapped to dense non-negative ids so the padding sentinel (-1) can never
    # collide with a user label; per-anchor positive counts are O(N) wrapper work.
    if labels is None:
        ids = jnp.arange(bsz, dtype=jnp.int32)           # unique labels == eye mask
        cnt = jnp.ones((bsz,), jnp.float32)
    else:
        base = jnp.asarray(labels).reshape(-1)
        if base.shape[0] != bsz:
            raise ValueError("Num of labels does not match num of features")
        _, ids = jnp.unique(base, size=bsz, return_inverse=True)
        ids = ids.reshape(-1).astype(jnp.int32)
        per_id = jnp.zeros((bsz,), jnp.float32).at[ids].add(1.0)
        cnt = per_id[ids]                                 # same-label count in the batch
    labels_tiled = jnp.tile(ids, n_views)                 # [N] view-major row order
    msum = jnp.tile(cnt * jnp.float32(n_views) - 1.0, n_views)  # positives/anchor (excl. self)
    # 1/msum; inf when an anchor has no positives, matching the reference's 0/0 blow-up.
    minv = 1.0 / msum

    # Self-similarity s_ii = ||x_i||^2 / T, recomputed outside the N^2 loop (O(N*D)).
    # Elementwise products match the MXU's (bf16*bf16 is exact in f32); only the
    # accumulation order differs.
    cf32 = cf.astype(jnp.float32)
    selfdot = jnp.sum(cf32 * cf32, axis=1) * jnp.float32(1.0 / float(temperature))

    d_pad = _round_up(dim, 128)                  # lane-align D; zero pad is dot-neutral
    tm, tn, n_pad, vmem_limit = _select_tiles(n_total, d_pad,
                                              jnp.dtype(matmul_dtype).itemsize)

    cf_pad = jnp.zeros((n_pad, d_pad), dtype=matmul_dtype).at[:n_total, :dim].set(cf)
    labels_pad = jnp.full((n_pad,), -1, dtype=jnp.int32).at[:n_total].set(labels_tiled)
    minv_pad = jnp.zeros((n_pad,), jnp.float32).at[:n_total].set(minv)
    sd_pad = jnp.zeros((n_pad,), jnp.float32).at[:n_total].set(selfdot)

    labels_row = labels_pad.reshape(n_pad, 1)
    labels_col = labels_pad.reshape(1, n_pad)
    minv_row = minv_pad.reshape(n_pad, 1)
    sd_row = sd_pad.reshape(n_pad, 1)

    n_row_blocks = n_pad // tm
    n_col_blocks = n_pad // tn

    kernel = functools.partial(
        _supcon_kernel,
        inv_temp=1.0 / float(temperature),
        loss_scale=-(float(temperature) / float(base_temperature)),
        n_valid=n_total, n_pad=n_pad, tm=tm, tn=tn)

    out = pl.pallas_call(
        kernel,
        out_shape=jax.ShapeDtypeStruct((n_row_blocks, tm, 1), jnp.float32),
        grid_spec=pltpu.PrefetchScalarGridSpec(
            num_scalar_prefetch=0,
            grid=(n_row_blocks, n_col_blocks),
            in_specs=[
                pl.BlockSpec((tm, 1), lambda i, j: (i, 0)),       # anchor labels
                pl.BlockSpec((1, tn), lambda i, j: (0, j)),       # contrast labels
                pl.BlockSpec((tm, 1), lambda i, j: (i, 0)),       # 1 / positive count
                pl.BlockSpec((tm, 1), lambda i, j: (i, 0)),       # self-similarity / T
                pl.BlockSpec((tm, d_pad), lambda i, j: (i, 0)),   # anchor feature rows
                # TODO(synk): pipeline_mode=pl.Buffered(3) here if profiling shows
                # exposed contrast-tile DMA latency at small D.
                pl.BlockSpec((tn, d_pad), lambda i, j: (j, 0)),   # contrast feature rows
            ],
            out_specs=pl.BlockSpec((1, tm, 1), lambda i, j: (i, 0, 0)),
            scratch_shapes=[pltpu.VMEM((tm, 1), jnp.float32)] * 3),
        compiler_params=pltpu.CompilerParams(
            dimension_semantics=("parallel", "arbitrary"),
            vmem_limit_bytes=vmem_limit),
    )(labels_row, labels_col, minv_row, sd_row, cf_pad, cf_pad)

    # loss.view(anchor_count, batch_size).mean() == mean over all N anchors; padded
    # rows were zeroed inside the kernel.
    return jnp.sum(out) / jnp.float32(n_total)


def _supcon_loss_ref(features, labels, temperature, base_temperature):
    """Pure-JAX reference mirroring the PyTorch module (contrast_mode='all')."""
    bsz, n_views, dim = features.shape
    cf = jnp.transpose(features, (1, 0, 2)).reshape(n_views * bsz, dim)
    if labels is None:
        mask = jnp.eye(bsz, dtype=jnp.float32)
    else:
        labels = labels.reshape(-1, 1)
        mask = (labels == labels.T).astype(jnp.float32)
    adc = jnp.matmul(cf, cf.T) / temperature
    logits = adc - jnp.max(adc, axis=1, keepdims=True)
    mask = jnp.tile(mask, (n_views, n_views))
    n = n_views * bsz
    logits_mask = 1.0 - jnp.eye(n, dtype=jnp.float32)
    mask = mask * logits_mask
    exp_logits = jnp.exp(logits) * logits_mask
    log_prob = logits - jnp.log(jnp.sum(exp_logits, axis=1, keepdims=True))
    mean_log_prob_pos = jnp.sum(mask * log_prob, axis=1) / jnp.sum(mask, axis=1)
    loss = -(temperature / base_temperature) * mean_log_prob_pos
    return jnp.mean(loss)


if __name__ == "__main__":
    key = jax.random.PRNGKey(0)
    k_feat, k_lab, k_feat2, k_lab2 = jax.random.split(key, 4)

    temperature, base_temperature = 0.1, 0.07

    # Small case: bsz=8, n_views=2, hidden=32 (N=16 -> single 128x128 padded tile).
    bsz, n_views, hidden = 8, 2, 32
    feats = jax.random.normal(k_feat, (bsz, n_views, hidden), dtype=jnp.float32)
    feats = feats / jnp.linalg.norm(feats, axis=-1, keepdims=True)  # SupCon-style L2 norm
    labels = jax.random.randint(k_lab, (bsz,), 0, 3)

    ref = _supcon_loss_ref(feats, labels, temperature, base_temperature)

    # f32 MXU operands: tight parity with the pure-JAX reference.
    loss_f32 = jax.block_until_ready(
        supcon_loss(feats, labels, temperature=temperature,
                    base_temperature=base_temperature, matmul_dtype=jnp.float32))
    assert jnp.allclose(loss_f32, ref, rtol=1e-4, atol=1e-4), (loss_f32, ref)

    # Default bf16 MXU operands: expected error is O(1e-2) at this temperature.
    loss_bf16 = jax.block_until_ready(
        supcon_loss(feats, labels, temperature=temperature,
                    base_temperature=base_temperature))
    assert bool(jnp.isfinite(loss_bf16)), loss_bf16
    assert abs(float(loss_bf16) - float(ref)) < 0.1 * abs(float(ref)) + 0.1, (loss_bf16, ref)

    # labels=None path (mask = eye): the only positive of each anchor is its other view.
    loss_eye = jax.block_until_ready(
        supcon_loss(feats, None, temperature=temperature,
                    base_temperature=base_temperature, matmul_dtype=jnp.float32))
    ref_eye = _supcon_loss_ref(feats, None, temperature, base_temperature)
    assert jnp.allclose(loss_eye, ref_eye, rtol=1e-4, atol=1e-4), (loss_eye, ref_eye)

    # Larger case: N=1040 triggers tm=512 / tn=256, multiple row/column blocks and a
    # fully padded column block (exercises the padding path at the bigger tiles).
    bsz2, n_views2 = 520, 2
    feats2 = jax.random.normal(k_feat2, (bsz2, n_views2, hidden), dtype=jnp.float32)
    feats2 = feats2 / jnp.linalg.norm(feats2, axis=-1, keepdims=True)
    labels2 = jax.random.randint(k_lab2, (bsz2,), 0, 7)
    loss2 = jax.block_until_ready(
        supcon_loss(feats2, labels2, temperature=temperature,
                    base_temperature=base_temperature, matmul_dtype=jnp.float32))
    ref2 = _supcon_loss_ref(feats2, labels2, temperature, base_temperature)
    assert jnp.allclose(loss2, ref2, rtol=1e-4, atol=1e-4), (loss2, ref2)

    print("KERNEL_OK")
</pallas_src>

<mosaic_0001>
module attributes {stable_mosaic.version = 11 : i64} {
  func.func @_supcon_kernel(%arg0: i32, %arg1: i32, %arg2: memref<128x1xi32, #tpu.memory_space<vmem>>, %arg3: memref<1x128xi32, #tpu.memory_space<vmem>>, %arg4: memref<128x1xf32, #tpu.memory_space<vmem>>, %arg5: memref<128x1xf32, #tpu.memory_space<vmem>>, %arg6: memref<128x128xf32, #tpu.memory_space<vmem>>, %arg7: memref<128x128xf32, #tpu.memory_space<vmem>>, %arg8: memref<1x128x1xf32, #tpu.memory_space<vmem>>, %arg9: memref<128x1xf32, #tpu.memory_space<vmem>>, %arg10: memref<128x1xf32, #tpu.memory_space<vmem>>, %arg11: memref<128x1xf32, #tpu.memory_space<vmem>>) attributes {dimension_semantics = [#tpu.dimension_semantics<parallel>, #tpu.dimension_semantics<arbitrary>], iteration_bounds = array<i64: 1, 1>, scalar_prefetch = 0 : i64, scratch_operands = 3 : i64, tpu.core_type = #tpu.core_type<tc>, window_params = [{transform_indices = @transform_0, window_bounds = array<i64: 128, 1>}, {transform_indices = @transform_1, window_bounds = array<i64: 1, 128>}, {transform_indices = @transform_2, window_bounds = array<i64: 128, 1>}, {transform_indices = @transform_3, window_bounds = array<i64: 128, 1>}, {transform_indices = @transform_4, window_bounds = array<i64: 128, 128>}, {transform_indices = @transform_5, window_bounds = array<i64: 128, 128>}, {transform_indices = @transform_6, window_bounds = array<i64: 1, 128, 1>}]} {
    %c0_i32 = arith.constant 0 : i32
    %0 = arith.cmpi eq, %arg1, %c0_i32 : i32
    %1 = arith.extui %0 : i1 to i32
    %c0_i32_0 = arith.constant 0 : i32
    %2 = arith.cmpi ne, %1, %c0_i32_0 : i32
    scf.if %2 {
      %cst_34 = arith.constant -1.000000e+30 : f32
      %67 = vector.broadcast %cst_34 : f32 to vector<128x1xf32>
      %c0_35 = arith.constant 0 : index
      %c0_36 = arith.constant 0 : index
      %68 = vector.load %arg9[%c0_35, %c0_36] : memref<128x1xf32, #tpu.memory_space<vmem>>, vector<128x1xf32>
      tpu.vector_store %arg9[%c0_35, %c0_36], %67 {strides = array<i32>} : memref<128x1xf32, #tpu.memory_space<vmem>>, vector<128x1xf32>,
      %cst_37 = arith.constant 0.000000e+00 : f32
      %69 = vector.broadcast %cst_37 : f32 to vector<128x1xf32>
      %c0_38 = arith.constant 0 : index
      %c0_39 = arith.constant 0 : index
      %70 = vector.load %arg10[%c0_38, %c0_39] : memref<128x1xf32, #tpu.memory_space<vmem>>, vector<128x1xf32>
      tpu.vector_store %arg10[%c0_38, %c0_39], %69 {strides = array<i32>} : memref<128x1xf32, #tpu.memory_space<vmem>>, vector<128x1xf32>,
      %cst_40 = arith.constant 0.000000e+00 : f32
      %71 = vector.broadcast %cst_40 : f32 to vector<128x1xf32>
      %c0_41 = arith.constant 0 : index
      %c0_42 = arith.constant 0 : index
      %72 = vector.load %arg11[%c0_41, %c0_42] : memref<128x1xf32, #tpu.memory_space<vmem>>, vector<128x1xf32>
      tpu.vector_store %arg11[%c0_41, %c0_42], %71 {strides = array<i32>} : memref<128x1xf32, #tpu.memory_space<vmem>>, vector<128x1xf32>,
    } else {
    }
    %c0 = arith.constant 0 : index
    %c0_1 = arith.constant 0 : index
    %3 = vector.load %arg6[%c0, %c0_1] : memref<128x128xf32, #tpu.memory_space<vmem>>, vector<128x128xf32>
    %c0_2 = arith.constant 0 : index
    %c0_3 = arith.constant 0 : index
    %4 = vector.load %arg7[%c0_2, %c0_3] : memref<128x128xf32, #tpu.memory_space<vmem>>, vector<128x128xf32>
    %cst = arith.constant dense<0.000000e+00> : vector<128x128xf32>
    %5 = tpu.matmul %3, %4, %cst {dimension_numbers = #tpu.dot_dimension_numbers<[1], [1], [0], [0], [0, 0, 1, 0], [], []>} : vector<128x128xf32>, vector<128x128xf32>, vector<128x128xf32> -> vector<128x128xf32>
    %cst_4 = arith.constant 1.000000e+01 : f32
    %6 = vector.broadcast %cst_4 : f32 to vector<128x128xf32>
    %7 = arith.mulf %5, %6 : vector<128x128xf32>
    %c0_5 = arith.constant 0 : index
    %c0_6 = arith.constant 0 : index
    %8 = vector.load %arg2[%c0_5, %c0_6] : memref<128x1xi32, #tpu.memory_space<vmem>>, vector<128x1xi32>
    %c0_7 = arith.constant 0 : index
    %c0_8 = arith.constant 0 : index
    %9 = vector.load %arg3[%c0_7, %c0_8] : memref<1x128xi32, #tpu.memory_space<vmem>>, vector<1x128xi32>
    %10 = vector.broadcast %8 : vector<128x1xi32> to vector<128x128xi32>
    %11 = vector.broadcast %9 : vector<1x128xi32> to vector<128x128xi32>
    %12 = arith.cmpi eq, %10, %11 : vector<128x128xi32>
    %c0_9 = arith.constant 0 : index
    %c0_10 = arith.constant 0 : index
    %13 = vector.load %arg9[%c0_9, %c0_10] : memref<128x1xf32, #tpu.memory_space<vmem>>, vector<128x1xf32>
    %cst_11 = arith.constant dense<0xFF800000> : vector<128xf32>
    %14 = vector.multi_reduction <maximumf>, %7, %cst_11 [1] : vector<128x128xf32> to vector<128xf32>
    %15 = vector.shape_cast %14 : vector<128xf32> to vector<128x1xf32>
    %16 = arith.maximumf %13, %15 : vector<128x1xf32>
    %17 = arith.subf %13, %16 : vector<128x1xf32>
    %18 = math.exp %17 : vector<128x1xf32>
    %19 = vector.broadcast %16 : vector<128x1xf32> to vector<128x128xf32>
    %20 = arith.subf %7, %19 : vector<128x128xf32>
    %21 = math.exp %20 : vector<128x128xf32>
    %c128_i32 = arith.constant 128 : i32
    %22 = arith.muli %arg1, %c128_i32 : i32
    %23 = tpu.iota {dimensions = array<i32: 1>} : vector<1x128xi32>
    %24 = vector.broadcast %22 : i32 to vector<1x128xi32>
    %25 = arith.addi %24, %23 : vector<1x128xi32>
    %c16_i32 = arith.constant 16 : i32
    %26 = vector.broadcast %c16_i32 : i32 to vector<1x128xi32>
    %27 = arith.cmpi slt, %25, %26 : vector<1x128xi32>
    %cst_12 = arith.constant 0.000000e+00 : f32
    %28 = vector.shape_cast %27 : vector<1x128xi1> to vector<1x128xi1>
    %29 = vector.broadcast %28 : vector<1x128xi1> to vector<128x128xi1>
    %30 = vector.broadcast %cst_12 : f32 to vector<128x128xf32>
    %31 = arith.select %29, %21, %30 : vector<128x128xi1>, vector<128x128xf32>
    %cst_13 = arith.constant dense<0.000000e+00> : vector<128xf32>
    %32 = vector.multi_reduction <add>, %31, %cst_13 [1] : vector<128x128xf32> to vector<128xf32>
    %33 = vector.shape_cast %32 : vector<128xf32> to vector<128x1xf32>
    %c128_i32_14 = arith.constant 128 : i32
    %34 = arith.muli %arg0, %c128_i32_14 : i32
    %35 = tpu.iota {dimensions = array<i32: 0>} : vector<128x1xi32>
    %36 = vector.broadcast %34 : i32 to vector<128x1xi32>
    %37 = arith.addi %36, %35 : vector<128x1xi32>
    %c128_i32_15 = arith.constant 128 : i32
    %38 = arith.muli %arg1, %c128_i32_15 : i32
    %39 = vector.broadcast %38 : i32 to vector<128x1xi32>
    %40 = arith.cmpi sge, %37, %39 : vector<128x1xi32>
    %c1_i32 = arith.constant 1 : i32
    %41 = arith.addi %arg1, %c1_i32 : i32
    %c128_i32_16 = arith.constant 128 : i32
    %42 = arith.muli %41, %c128_i32_16 : i32
    %43 = vector.broadcast %42 : i32 to vector<128x1xi32>
    %44 = arith.cmpi slt, %37, %43 : vector<128x1xi32>
    %45 = arith.andi %40, %44 : vector<128x1xi1>
    %c0_17 = arith.constant 0 : index
    %c0_18 = arith.constant 0 : index
    %46 = vector.load %arg5[%c0_17, %c0_18] : memref<128x1xf32, #tpu.memory_space<vmem>>, vector<128x1xf32>
    %47 = arith.subf %46, %16 : vector<128x1xf32>
    %48 = math.exp %47 : vector<128x1xf32>
    %cst_19 = arith.constant 0.000000e+00 : f32
    %49 = vector.broadcast %cst_19 : f32 to vector<128x1xf32>
    %50 = arith.select %45, %48, %49 : vector<128x1xi1>, vector<128x1xf32>
    %51 = arith.subf %33, %50 : vector<128x1xf32>
    %c0_20 = arith.constant 0 : index
    %c0_21 = arith.constant 0 : index
    %52 = vector.load %arg10[%c0_20, %c0_21] : memref<128x1xf32, #tpu.memory_space<vmem>>, vector<128x1xf32>
    %53 = arith.mulf %18, %52 : vector<128x1xf32>
    %54 = arith.addf %53, %51 : vector<128x1xf32>
    %c0_22 = arith.constant 0 : index
    %c0_23 = arith.constant 0 : index
    %55 = vector.load %arg10[%c0_22, %c0_23] : memref<128x1xf32, #tpu.memory_space<vmem>>, vector<128x1xf32>
    tpu.vector_store %arg10[%c0_22, %c0_23], %54 {strides = array<i32>} : memref<128x1xf32, #tpu.memory_space<vmem>>, vector<128x1xf32>,
    %c0_24 = arith.constant 0 : index
    %c0_25 = arith.constant 0 : index
    %56 = vector.load %arg9[%c0_24, %c0_25] : memref<128x1xf32, #tpu.memory_space<vmem>>, vector<128x1xf32>
    tpu.vector_store %arg9[%c0_24, %c0_25], %16 {strides = array<i32>} : memref<128x1xf32, #tpu.memory_space<vmem>>, vector<128x1xf32>,
    %c0_26 = arith.constant 0 : index
    %c0_27 = arith.constant 0 : index
    %57 = vector.load %arg11[%c0_26, %c0_27] : memref<128x1xf32, #tpu.memory_space<vmem>>, vector<128x1xf32>
    %cst_28 = arith.constant 0.000000e+00 : f32
    %58 = vector.broadcast %cst_28 : f32 to vector<128x128xf32>
    %59 = arith.select %12, %7, %58 : vector<128x128xi1>, vector<128x128xf32>
    %cst_29 = arith.constant dense<0.000000e+00> : vector<128xf32>
    %60 = vector.multi_reduction <add>, %59, %cst_29 [1] : vector<128x128xf32> to vector<128xf32>
    %61 = vector.shape_cast %60 : vector<128xf32> to vector<128x1xf32>
    %62 = arith.addf %57, %61 : vector<128x1xf32>
    %c0_30 = arith.constant 0 : index
    %c0_31 = arith.constant 0 : index
    %63 = vector.load %arg11[%c0_30, %c0_31] : memref<128x1xf32, #tpu.memory_space<vmem>>, vector<128x1xf32>
    tpu.vector_store %arg11[%c0_30, %c0_31], %62 {strides = array<i32>} : memref<128x1xf32, #tpu.memory_space<vmem>>, vector<128x1xf32>,
    %c0_i32_32 = arith.constant 0 : i32
    %64 = arith.cmpi eq, %arg1, %c0_i32_32 : i32
    %65 = arith.extui %64 : i1 to i32
    %c0_i32_33 = arith.constant 0 : i32
    %66 = arith.cmpi ne, %65, %c0_i32_33 : i32
    scf.if %66 {
      %c0_34 = arith.constant 0 : index
      %c0_35 = arith.constant 0 : index
      %67 = vector.load %arg10[%c0_34, %c0_35] : memref<128x1xf32, #tpu.memory_space<vmem>>, vector<128x1xf32>
      %cst_36 = arith.constant 9.99999991E-38 : f32
      %68 = vector.broadcast %cst_36 : f32 to vector<128x1xf32>
      %69 = arith.maximumf %67, %68 : vector<128x1xf32>
      %c0_37 = arith.constant 0 : index
      %c0_38 = arith.constant 0 : index
      %70 = vector.load %arg9[%c0_37, %c0_38] : memref<128x1xf32, #tpu.memory_space<vmem>>, vector<128x1xf32>
      %71 = math.log %69 : vector<128x1xf32>
      %72 = arith.addf %70, %71 : vector<128x1xf32>
      %c0_39 = arith.constant 0 : index
      %c0_40 = arith.constant 0 : index
      %73 = vector.load %arg11[%c0_39, %c0_40] : memref<128x1xf32, #tpu.memory_space<vmem>>, vector<128x1xf32>
      %c0_41 = arith.constant 0 : index
      %c0_42 = arith.constant 0 : index
      %74 = vector.load %arg5[%c0_41, %c0_42] : memref<128x1xf32, #tpu.memory_space<vmem>>, vector<128x1xf32>
      %75 = arith.subf %73, %74 : vector<128x1xf32>
      %c0_43 = arith.constant 0 : index
      %c0_44 = arith.constant 0 : index
      %76 = vector.load %arg4[%c0_43, %c0_44] : memref<128x1xf32, #tpu.memory_space<vmem>>, vector<128x1xf32>
      %77 = arith.mulf %75, %76 : vector<128x1xf32>
      %78 = arith.subf %77, %72 : vector<128x1xf32>
      %cst_45 = arith.constant -1.42857146 : f32
      %79 = vector.broadcast %cst_45 : f32 to vector<128x1xf32>
      %80 = arith.mulf %79, %78 : vector<128x1xf32>
      %c16_i32_46 = arith.constant 16 : i32
      %81 = vector.broadcast %c16_i32_46 : i32 to vector<128x1xi32>
      %82 = arith.cmpi slt, %37, %81 : vector<128x1xi32>
      %cst_47 = arith.constant 0.000000e+00 : f32
      %83 = vector.broadcast %cst_47 : f32 to vector<128x1xf32>
      %84 = arith.select %82, %80, %83 : vector<128x1xi1>, vector<128x1xf32>
      %85 = vector.shape_cast %84 : vector<128x1xf32> to vector<1x128x1xf32>
      %c0_48 = arith.constant 0 : index
      %c0_49 = arith.constant 0 : index
      %c0_50 = arith.constant 0 : index
      %86 = vector.load %arg8[%c0_48, %c0_49, %c0_50] : memref<1x128x1xf32, #tpu.memory_space<vmem>>, vector<1x128x1xf32>
      tpu.vector_store %arg8[%c0_48, %c0_49, %c0_50], %85 {strides = array<i32>} : memref<1x128x1xf32, #tpu.memory_space<vmem>>, vector<1x128x1xf32>,
    } else {
    }
    return
  }
  func.func @transform_0(%arg0: i32, %arg1: i32) -> (i32, i32) {
    %c0_i32 = arith.constant 0 : i32
    %c0_i32_0 = arith.constant 0 : i32
    return %arg0, %c0_i32 : i32, i32
  }
  func.func @transform_1(%arg0: i32, %arg1: i32) -> (i32, i32) {
    %c0_i32 = arith.constant 0 : i32
    %c0_i32_0 = arith.constant 0 : i32
    return %c0_i32, %arg1 : i32, i32
  }
  func.func @transform_2(%arg0: i32, %arg1: i32) -> (i32, i32) {
    %c0_i32 = arith.constant 0 : i32
    %c0_i32_0 = arith.constant 0 : i32
    return %arg0, %c0_i32 : i32, i32
  }
  func.func @transform_3(%arg0: i32, %arg1: i32) -> (i32, i32) {
    %c0_i32 = arith.constant 0 : i32
    %c0_i32_0 = arith.constant 0 : i32
    return %arg0, %c0_i32 : i32, i32
  }
  func.func @transform_4(%arg0: i32, %arg1: i32) -> (i32, i32) {
    %c0_i32 = arith.constant 0 : i32
    %c0_i32_0 = arith.constant 0 : i32
    return %arg0, %c0_i32 : i32, i32
  }
  func.func @transform_5(%arg0: i32, %arg1: i32) -> (i32, i32) {
    %c0_i32 = arith.constant 0 : i32
    %c0_i32_0 = arith.constant 0 : i32
    return %arg1, %c0_i32 : i32, i32
  }
  func.func @transform_6(%arg0: i32, %arg1: i32) -> (i32, i32, i32) {
    %c0_i32 = arith.constant 0 : i32
    %c0_i32_0 = arith.constant 0 : i32
    %c0_i32_1 = arith.constant 0 : i32
    return %arg0, %c0_i32, %c0_i32_0 : i32, i32, i32
  }
}

</mosaic_0001>

<llo_original>
// kernel: tpu_custom_call.1
$region0: #{tpu_custom_call.1}
  #allocation0 [shape = 'u32[]', space=smem, size = 0x4, offset = 0x4, fixed_abs, tag = 'smem constant byte address 0x4 - core index']
  #allocation1 [shape = 'u32[72,128]{1,0:T(1,128)}', space=vmem, size = 0x9000, scoped, tag = 'internal scratch']
  #allocation2 [shape = 'f32[128,1]{1,0:T(8,128)}', space=vmem, size = 0x10000, scoped, tag = 'scratch operand']
  #allocation3 [shape = 'f32[128,1]{1,0:T(8,128)}', space=vmem, size = 0x10000, scoped, tag = 'scratch operand']
  #allocation4 [shape = 'f32[128,1]{1,0:T(8,128)}', space=vmem, size = 0x10000, scoped, tag = 'scratch operand']
  %s0 = inlined_call_operand.vmem [shape: s32[128,1], index: 0, kind: input, shape index: {}]
  %s1 = inlined_call_operand.vmem [shape: s32[1,128], index: 1, kind: input, shape index: {}]
  %s2 = inlined_call_operand.vmem [shape: f32[128,1], index: 2, kind: input, shape index: {}]
  %s3 = inlined_call_operand.vmem [shape: f32[128,1], index: 3, kind: input, shape index: {}]
  %s4 = inlined_call_operand.vmem [shape: f32[128,128], index: 4, kind: input, shape index: {}]
  %s5 = inlined_call_operand.vmem [shape: f32[128,128], index: 5, kind: input, shape index: {}]
  %s6 = inlined_call_operand.vmem [shape: f32[1,128,1], index: 6, kind: output, shape index: {}]
  %s7 = sld [smem:[#allocation0]]
  $region42: #{tpu_custom_call.1} parent=0
    _
  %s9 = ssub.s32 1, %s7
  %s10 = scalar_select 0, %s9, %s7
  // Predicated region
  $region2: #{tpu_custom_call.1} parent=0 // pred_check
    _
  $region3: #{tpu_custom_call.1} parent=0 // pred_check_branch
    %12 = sbr.rel (0) target = $region5
  $region4: #{tpu_custom_call.1} parent=0 // pred_region
    _
  $region5: #{tpu_custom_call.1} parent=0 // pred_fallthru
    _
  // Predicated region
  $region6: #{tpu_custom_call.1} parent=0 // pred_check
    _
  $region7: #{tpu_custom_call.1} parent=0 // pred_check_branch
    %14 = sbr.rel (0) target = $region9
  $region8: #{tpu_custom_call.1} parent=0 // pred_region
    _
  $region9: #{tpu_custom_call.1} parent=0 // pred_fallthru
    _
  // Predicated region
  $region10: #{tpu_custom_call.1} parent=0 // pred_check
    _
  $region11: #{tpu_custom_call.1} parent=0 // pred_check_branch
    %16 = sbr.rel (0) target = $region13
  $region12: #{tpu_custom_call.1} parent=0 // pred_region
    _
  $region13: #{tpu_custom_call.1} parent=0 // pred_fallthru
    _
  // Predicated region
  $region14: #{tpu_custom_call.1} parent=0 // pred_check
    _
  $region15: #{tpu_custom_call.1} parent=0 // pred_check_branch
    %18 = sbr.rel (0) target = $region17
  $region16: #{tpu_custom_call.1} parent=0 // pred_region
    _
  $region17: #{tpu_custom_call.1} parent=0 // pred_fallthru
    _
  // Predicated region
  $region18: #{tpu_custom_call.1} parent=0 // pred_check
    _
  $region19: #{tpu_custom_call.1} parent=0 // pred_check_branch
    %20 = sbr.rel (0) target = $region21
  $region20: #{tpu_custom_call.1} parent=0 // pred_region
    _
  $region21: #{tpu_custom_call.1} parent=0 // pred_fallthru
    _
  // Predicated region
  $region22: #{tpu_custom_call.1} parent=0 // pred_check
    _
  $region23: #{tpu_custom_call.1} parent=0 // pred_check_branch
    %22 = sbr.rel (0) target = $region25
  $region24: #{tpu_custom_call.1} parent=0 // pred_region
    _
  $region25: #{tpu_custom_call.1} parent=0 // pred_fallthru
    _
  %p23 = scmp.eq.s32.totalorder 0, 0
  // Predicated region
  $region26: #{tpu_custom_call.1} parent=0 // pred_check
    %p24 = pneg %p23
  $region27: #{tpu_custom_call.1} parent=0 // pred_check_branch
    %26 = sbr.rel (%p24) target = $region29
  $region28: #{tpu_custom_call.1} parent=0 // pred_region
    %vm27 = vcmask 7168
    %28 = vst.msk [vmem:[#allocation2] sm:$0xff] %vm27, -1e+30
    %29 = vst.msk [vmem:[#allocation2 + $0x8] sm:$0xff] %vm27, -1e+30
    %30 = vst.msk [vmem:[#allocation2 + $0x10] sm:$0xff] %vm27, -1e+30
    %31 = vst.msk [vmem:[#allocation2 + $0x18] sm:$0xff] %vm27, -1e+30
    %32 = vst.msk [vmem:[#allocation2 + $0x20] sm:$0xff] %vm27, -1e+30
    %33 = vst.msk [vmem:[#allocation2 + $0x28] sm:$0xff] %vm27, -1e+30
    %34 = vst.msk [vmem:[#allocation2 + $0x30] sm:$0xff] %vm27, -1e+30
    %35 = vst.msk [vmem:[#allocation2 + $0x38] sm:$0xff] %vm27, -1e+30
    %36 = vst.msk [vmem:[#allocation2 + $0x40] sm:$0xff] %vm27, -1e+30
    %37 = vst.msk [vmem:[#allocation2 + $0x48] sm:$0xff] %vm27, -1e+30
    %38 = vst.msk [vmem:[#allocation2 + $0x50] sm:$0xff] %vm27, -1e+30
    %39 = vst.msk [vmem:[#allocation2 + $0x58] sm:$0xff] %vm27, -1e+30
    %40 = vst.msk [vmem:[#allocation2 + $0x60] sm:$0xff] %vm27, -1e+30
    %41 = vst.msk [vmem:[#allocation2 + $0x68] sm:$0xff] %vm27, -1e+30
    %42 = vst.msk [vmem:[#allocation2 + $0x70] sm:$0xff] %vm27, -1e+30
    %43 = vst.msk [vmem:[#allocation2 + $0x78] sm:$0xff] %vm27, -1e+30
    %44 = vst.msk [vmem:[#allocation3] sm:$0xff] %vm27, 0.0
    %45 = vst.msk [vmem:[#allocation3 + $0x8] sm:$0xff] %vm27, 0.0
    %46 = vst.msk [vmem:[#allocation3 + $0x10] sm:$0xff] %vm27, 0.0
    %47 = vst.msk [vmem:[#allocation3 + $0x18] sm:$0xff] %vm27, 0.0
    %48 = vst.msk [vmem:[#allocation3 + $0x20] sm:$0xff] %vm27, 0.0
    %49 = vst.msk [vmem:[#allocation3 + $0x28] sm:$0xff] %vm27, 0.0
    %50 = vst.msk [vmem:[#allocation3 + $0x30] sm:$0xff] %vm27, 0.0
    %51 = vst.msk [vmem:[#allocation3 + $0x38] sm:$0xff] %vm27, 0.0
    %52 = vst.msk [vmem:[#allocation3 + $0x40] sm:$0xff] %vm27, 0.0
    %53 = vst.msk [vmem:[#allocation3 + $0x48] sm:$0xff] %vm27, 0.0
    %54 = vst.msk [vmem:[#allocation3 + $0x50] sm:$0xff] %vm27, 0.0
    %55 = vst.msk [vmem:[#allocation3 + $0x58] sm:$0xff] %vm27, 0.0
    %56 = vst.msk [vmem:[#allocation3 + $0x60] sm:$0xff] %vm27, 0.0
    %57 = vst.msk [vmem:[#allocation3 + $0x68] sm:$0xff] %vm27, 0.0
    %58 = vst.msk [vmem:[#allocation3 + $0x70] sm:$0xff] %vm27, 0.0
    %59 = vst.msk [vmem:[#allocation3 + $0x78] sm:$0xff] %vm27, 0.0
    %60 = vst.msk [vmem:[#allocation4] sm:$0xff] %vm27, 0.0
    %61 = vst.msk [vmem:[#allocation4 + $0x8] sm:$0xff] %vm27, 0.0
    %62 = vst.msk [vmem:[#allocation4 + $0x10] sm:$0xff] %vm27, 0.0
    %63 = vst.msk [vmem:[#allocation4 + $0x18] sm:$0xff] %vm27, 0.0
    %64 = vst.msk [vmem:[#allocation4 + $0x20] sm:$0xff] %vm27, 0.0
    %65 = vst.msk [vmem:[#allocation4 + $0x28] sm:$0xff] %vm27, 0.0
    %66 = vst.msk [vmem:[#allocation4 + $0x30] sm:$0xff] %vm27, 0.0
    %67 = vst.msk [vmem:[#allocation4 + $0x38] sm:$0xff] %vm27, 0.0
    %68 = vst.msk [vmem:[#allocation4 + $0x40] sm:$0xff] %vm27, 0.0
    %69 = vst.msk [vmem:[#allocation4 + $0x48] sm:$0xff] %vm27, 0.0
    %70 = vst.msk [vmem:[#allocation4 + $0x50] sm:$0xff] %vm27, 0.0
    %71 = vst.msk [vmem:[#allocation4 + $0x58] sm:$0xff] %vm27, 0.0
    %72 = vst.msk [vmem:[#allocation4 + $0x60] sm:$0xff] %vm27, 0.0
    %73 = vst.msk [vmem:[#allocation4 + $0x68] sm:$0xff] %vm27, 0.0
    %74 = vst.msk [vmem:[#allocation4 + $0x70] sm:$0xff] %vm27, 0.0
    %75 = vst.msk [vmem:[#allocation4 + $0x78] sm:$0xff] %vm27, 0.0
  $region29: #{tpu_custom_call.1} parent=0 // pred_fallthru
    _
  %v76 = vld [vmem:[%s4] sm:$0xff]
  %v77 = vld [vmem:[%s4 + $0x8] sm:$0xff]
  %v78 = vld [vmem:[%s4 + $0x10] sm:$0xff]
  %v79 = vld [vmem:[%s4 + $0x18] sm:$0xff]
  %v80 = vld [vmem:[%s4 + $0x20] sm:$0xff]
  %v81 = vld [vmem:[%s4 + $0x28] sm:$0xff]
  %v82 = vld [vmem:[%s4 + $0x30] sm:$0xff]
  %v83 = vld [vmem:[%s4 + $0x38] sm:$0xff]
  %v84 = vld [vmem:[%s4 + $0x40] sm:$0xff]
  %v85 = vld [vmem:[%s4 + $0x48] sm:$0xff]
  %v86 = vld [vmem:[%s4 + $0x50] sm:$0xff]
  %v87 = vld [vmem:[%s4 + $0x58] sm:$0xff]
  %v88 = vld [vmem:[%s4 + $0x60] sm:$0xff]
  %v89 = vld [vmem:[%s4 + $0x68] sm:$0xff]
  %v90 = vld [vmem:[%s4 + $0x70] sm:$0xff]
  %v91 = vld [vmem:[%s4 + $0x78] sm:$0xff]
  %v92 = vld [vmem:[%s5] sm:$0xff]
  %v93 = vld [vmem:[%s5 + $0x8] sm:$0xff]
  %v94 = vld [vmem:[%s5 + $0x10] sm:$0xff]
  %v95 = vld [vmem:[%s5 + $0x18] sm:$0xff]
  %v96 = vld [vmem:[%s5 + $0x20] sm:$0xff]
  %v97 = vld [vmem:[%s5 + $0x28] sm:$0xff]
  %v98 = vld [vmem:[%s5 + $0x30] sm:$0xff]
  %v99 = vld [vmem:[%s5 + $0x38] sm:$0xff]
  %v100 = vld [vmem:[%s5 + $0x40] sm:$0xff]
  %v101 = vld [vmem:[%s5 + $0x48] sm:$0xff]
  %v102 = vld [vmem:[%s5 + $0x50] sm:$0xff]
  %v103 = vld [vmem:[%s5 + $0x58] sm:$0xff]
  %v104 = vld [vmem:[%s5 + $0x60] sm:$0xff]
  %v105 = vld [vmem:[%s5 + $0x68] sm:$0xff]
  %v106 = vld [vmem:[%s5 + $0x70] sm:$0xff]
  %v107 = vld [vmem:[%s5 + $0x78] sm:$0xff]
  %108 = vmatpush.xpose.msra.mxu0 %v107
  %109 = vmatpush.xpose.msra.mxu0 %v106
  %110 = vmatpush.xpose.msra.mxu0 %v105
  %111 = vmatpush.xpose.msra.mxu0 %v104
  %112 = vmatpush.xpose.msra.mxu0 %v103
  %113 = vmatpush.xpose.msra.mxu0 %v102
  %114 = vmatpush.xpose.msra.mxu0 %v101
  %115 = vmatpush.xpose.msra.mxu0 %v100
  %116 = vmatpush.xpose.msra.mxu0 %v99
  %117 = vmatpush.xpose.msra.mxu0 %v98
  %118 = vmatpush.xpose.msra.mxu0 %v97
  %119 = vmatpush.xpose.msra.mxu0 %v96
  %120 = vmatpush.xpose.msra.mxu0 %v95
  %121 = vmatpush.xpose.msra.mxu0 %v94
  %122 = vmatpush.xpose.msra.mxu0 %v93
  %123 = vmatpush.xpose.msra.mxu0 %v92
  %124 = vmatmul.f32.gmra.mxu0 %v76
  %v125 = vpop.f32.mrf.mxu0
  %v126 = vadd.f32 0.0, %v125
  %127 = vmatmul.f32.gmra.mxu0 %v77
  %v128 = vpop.f32.mrf.mxu0
  %v129 = vadd.f32 0.0, %v128
  %130 = vmatmul.f32.gmra.mxu0 %v78
  %v131 = vpop.f32.mrf.mxu0
  %v132 = vadd.f32 0.0, %v131
  %133 = vmatmul.f32.gmra.mxu0 %v79
  %v134 = vpop.f32.mrf.mxu0
  %v135 = vadd.f32 0.0, %v134
  %136 = vmatmul.f32.gmra.mxu0 %v80
  %v137 = vpop.f32.mrf.mxu0
  %v138 = vadd.f32 0.0, %v137
  %139 = vmatmul.f32.gmra.mxu0 %v81
  %v140 = vpop.f32.mrf.mxu0
  %v141 = vadd.f32 0.0, %v140
  %142 = vmatmul.f32.gmra.mxu0 %v82
  %v143 = vpop.f32.mrf.mxu0
  %v144 = vadd.f32 0.0, %v143
  %145 = vmatmul.f32.gmra.mxu0 %v83
  %v146 = vpop.f32.mrf.mxu0
  %v147 = vadd.f32 0.0, %v146
  %148 = vmatmul.f32.gmra.mxu0 %v84
  %v149 = vpop.f32.mrf.mxu0
  %v150 = vadd.f32 0.0, %v149
  %151 = vmatmul.f32.gmra.mxu0 %v85
  %v152 = vpop.f32.mrf.mxu0
  %v153 = vadd.f32 0.0, %v152
  %154 = vmatmul.f32.gmra.mxu0 %v86
  %v155 = vpop.f32.mrf.mxu0
  %v156 = vadd.f32 0.0, %v155
  %157 = vmatmul.f32.gmra.mxu0 %v87
  %v158 = vpop.f32.mrf.mxu0
  %v159 = vadd.f32 0.0, %v158
  %160 = vmatmul.f32.gmra.mxu0 %v88
  %v161 = vpop.f32.mrf.mxu0
  %v162 = vadd.f32 0.0, %v161
  %163 = vmatmul.f32.gmra.mxu0 %v89
  %v164 = vpop.f32.mrf.mxu0
  %v165 = vadd.f32 0.0, %v164
  %166 = vmatmul.f32.gmra.mxu0 %v90
  %v167 = vpop.f32.mrf.mxu0
  %v168 = vadd.f32 0.0, %v167
  %169 = vmatmul.f32.gmra.mxu0 %v91
  %v170 = vpop.f32.mrf.mxu0
  %v171 = vadd.f32 0.0, %v170
  %172 = vdwg.mxu0
  %v173 = vmul.f32 %v126, 10.0
  %v174 = vmul.f32 %v129, 10.0
  %v175 = vmul.f32 %v132, 10.0
  %v176 = vmul.f32 %v135, 10.0
  %v177 = vmul.f32 %v138, 10.0
  %v178 = vmul.f32 %v141, 10.0
  %v179 = vmul.f32 %v144, 10.0
  %v180 = vmul.f32 %v147, 10.0
  %v181 = vmul.f32 %v150, 10.0
  %v182 = vmul.f32 %v153, 10.0
  %v183 = vmul.f32 %v156, 10.0
  %v184 = vmul.f32 %v159, 10.0
  %v185 = vmul.f32 %v162, 10.0
  %v186 = vmul.f32 %v165, 10.0
  %v187 = vmul.f32 %v168, 10.0
  %v188 = vmul.f32 %v171, 10.0
  %v189 = vld [vmem:[%s0] sm:$0xff]
  %v190 = vld [vmem:[%s0 + $0x8] sm:$0xff]
  %v191 = vld [vmem:[%s0 + $0x10] sm:$0xff]
  %v192 = vld [vmem:[%s0 + $0x18] sm:$0xff]
  %v193 = vld [vmem:[%s0 + $0x20] sm:$0xff]
  %v194 = vld [vmem:[%s0 + $0x28] sm:$0xff]
  %v195 = vld [vmem:[%s0 + $0x30] sm:$0xff]
  %v196 = vld [vmem:[%s0 + $0x38] sm:$0xff]
  %v197 = vld [vmem:[%s0 + $0x40] sm:$0xff]
  %v198 = vld [vmem:[%s0 + $0x48] sm:$0xff]
  %v199 = vld [vmem:[%s0 + $0x50] sm:$0xff]
  %v200 = vld [vmem:[%s0 + $0x58] sm:$0xff]
  %v201 = vld [vmem:[%s0 + $0x60] sm:$0xff]
  %v202 = vld [vmem:[%s0 + $0x68] sm:$0xff]
  %v203 = vld [vmem:[%s0 + $0x70] sm:$0xff]
  %v204 = vld [vmem:[%s0 + $0x78] sm:$0xff]
  %v205 = vld [vmem:[%s1] sm:$0x1]
  %206 = vset.pattern.permute.xlu0 0
  %207 = vperm.xlu0 %206, %v189
  %v208 = vpop.permute.xlu0 %207
  %209 = vset.pattern.permute.xlu0 0
  %210 = vperm.xlu0 %209, %v190
  %v211 = vpop.permute.xlu0 %210
  %212 = vset.pattern.permute.xlu0 0
  %213 = vperm.xlu0 %212, %v191
  %v214 = vpop.permute.xlu0 %213
  %215 = vset.pattern.permute.xlu0 0
  %216 = vperm.xlu0 %215, %v192
  %v217 = vpop.permute.xlu0 %216
  %218 = vset.pattern.permute.xlu0 0
  %219 = vperm.xlu0 %218, %v193
  %v220 = vpop.permute.xlu0 %219
  %221 = vset.pattern.permute.xlu0 0
  %222 = vperm.xlu0 %221, %v194
  %v223 = vpop.permute.xlu0 %222
  %224 = vset.pattern.permute.xlu0 0
  %225 = vperm.xlu0 %224, %v195
  %v226 = vpop.permute.xlu0 %225
  %227 = vset.pattern.permute.xlu0 0
  %228 = vperm.xlu0 %227, %v196
  %v229 = vpop.permute.xlu0 %228
  %230 = vset.pattern.permute.xlu0 0
  %231 = vperm.xlu0 %230, %v197
  %v232 = vpop.permute.xlu0 %231
  %233 = vset.pattern.permute.xlu0 0
  %234 = vperm.xlu0 %233, %v198
  %v235 = vpop.permute.xlu0 %234
  %236 = vset.pattern.permute.xlu0 0
  %237 = vperm.xlu0 %236, %v199
  %v238 = vpop.permute.xlu0 %237
  %239 = vset.pattern.permute.xlu0 0
  %240 = vperm.xlu0 %239, %v200
  %v241 = vpop.permute.xlu0 %240
  %242 = vset.pattern.permute.xlu0 0
  %243 = vperm.xlu0 %242, %v201
  %v244 = vpop.permute.xlu0 %243
  %245 = vset.pattern.permute.xlu0 0
  %246 = vperm.xlu0 %245, %v202
  %v247 = vpop.permute.xlu0 %246
  %248 = vset.pattern.permute.xlu0 0
  %249 = vperm.xlu0 %248, %v203
  %v250 = vpop.permute.xlu0 %249
  %251 = vset.pattern.permute.xlu0 0
  %252 = vperm.xlu0 %251, %v204
  %v253 = vpop.permute.xlu0 %252
  %v254 = vperm.slane %v205, 0
  %vm255 = vcmp.eq.s32.totalorder %v208, %v254
  %vm256 = vcmp.eq.s32.totalorder %v211, %v254
  %vm257 = vcmp.eq.s32.totalorder %v214, %v254
  %vm258 = vcmp.eq.s32.totalorder %v217, %v254
  %vm259 = vcmp.eq.s32.totalorder %v220, %v254
  %vm260 = vcmp.eq.s32.totalorder %v223, %v254
  %vm261 = vcmp.eq.s32.totalorder %v226, %v254
  %vm262 = vcmp.eq.s32.totalorder %v229, %v254
  %vm263 = vcmp.eq.s32.totalorder %v232, %v254
  %vm264 = vcmp.eq.s32.totalorder %v235, %v254
  %vm265 = vcmp.eq.s32.totalorder %v238, %v254
  %vm266 = vcmp.eq.s32.totalorder %v241, %v254
  %vm267 = vcmp.eq.s32.totalorder %v244, %v254
  %vm268 = vcmp.eq.s32.totalorder %v247, %v254
  %vm269 = vcmp.eq.s32.totalorder %v250, %v254
  %vm270 = vcmp.eq.s32.totalorder %v253, %v254
  %v271 = vld [vmem:[#allocation2] sm:$0xff]
  %v272 = vld [vmem:[#allocation2 + $0x8] sm:$0xff]
  %v273 = vld [vmem:[#allocation2 + $0x10] sm:$0xff]
  %v274 = vld [vmem:[#allocation2 + $0x18] sm:$0xff]
  %v275 = vld [vmem:[#allocation2 + $0x20] sm:$0xff]
  %v276 = vld [vmem:[#allocation2 + $0x28] sm:$0xff]
  %v277 = vld [vmem:[#allocation2 + $0x30] sm:$0xff]
  %v278 = vld [vmem:[#allocation2 + $0x38] sm:$0xff]
  %v279 = vld [vmem:[#allocation2 + $0x40] sm:$0xff]
  %v280 = vld [vmem:[#allocation2 + $0x48] sm:$0xff]
  %v281 = vld [vmem:[#allocation2 + $0x50] sm:$0xff]
  %v282 = vld [vmem:[#allocation2 + $0x58] sm:$0xff]
  %v283 = vld [vmem:[#allocation2 + $0x60] sm:$0xff]
  %v284 = vld [vmem:[#allocation2 + $0x68] sm:$0xff]
  %v285 = vld [vmem:[#allocation2 + $0x70] sm:$0xff]
  %v286 = vld [vmem:[#allocation2 + $0x78] sm:$0xff]
  %287 = vmax.xlane.f32.xlu0 %v173
  %v288 = vpop.xlane.xlu0 %287
  %289 = vmax.xlane.f32.xlu0 %v174
  %v290 = vpop.xlane.xlu0 %289
  %291 = vmax.xlane.f32.xlu0 %v175
  %v292 = vpop.xlane.xlu0 %291
  %293 = vmax.xlane.f32.xlu0 %v176
  %v294 = vpop.xlane.xlu0 %293
  %295 = vmax.xlane.f32.xlu0 %v177
  %v296 = vpop.xlane.xlu0 %295
  %297 = vmax.xlane.f32.xlu0 %v178
  %v298 = vpop.xlane.xlu0 %297
  %299 = vmax.xlane.f32.xlu0 %v179
  %v300 = vpop.xlane.xlu0 %299
  %301 = vmax.xlane.f32.xlu0 %v180
  %v302 = vpop.xlane.xlu0 %301
  %303 = vmax.xlane.f32.xlu0 %v181
  %v304 = vpop.xlane.xlu0 %303
  %305 = vmax.xlane.f32.xlu0 %v182
  %v306 = vpop.xlane.xlu0 %305
  %307 = vmax.xlane.f32.xlu0 %v183
  %v308 = vpop.xlane.xlu0 %307
  %309 = vmax.xlane.f32.xlu0 %v184
  %v310 = vpop.xlane.xlu0 %309
  %311 = vmax.xlane.f32.xlu0 %v185
  %v312 = vpop.xlane.xlu0 %311
  %313 = vmax.xlane.f32.xlu0 %v186
  %v314 = vpop.xlane.xlu0 %313
  %315 = vmax.xlane.f32.xlu0 %v187
  %v316 = vpop.xlane.xlu0 %315
  %317 = vmax.xlane.f32.xlu0 %v188
  %v318 = vpop.xlane.xlu0 %317
  %v319 = vmax.f32 %v271, %v288
  %v320 = vmax.f32 %v272, %v290
  %v321 = vmax.f32 %v273, %v292
  %v322 = vmax.f32 %v274, %v294
  %v323 = vmax.f32 %v275, %v296
  %v324 = vmax.f32 %v276, %v298
  %v325 = vmax.f32 %v277, %v300
  %v326 = vmax.f32 %v278, %v302
  %v327 = vmax.f32 %v279, %v304
  %v328 = vmax.f32 %v280, %v306
  %v329 = vmax.f32 %v281, %v308
  %v330 = vmax.f32 %v282, %v310
  %v331 = vmax.f32 %v283, %v312
  %v332 = vmax.f32 %v284, %v314
  %v333 = vmax.f32 %v285, %v316
  %v334 = vmax.f32 %v286, %v318
  %v335 = vsub.f32 %v271, %v319
  %v336 = vsub.f32 %v272, %v320
  %v337 = vsub.f32 %v273, %v321
  %v338 = vsub.f32 %v274, %v322
  %v339 = vsub.f32 %v275, %v323
  %v340 = vsub.f32 %v276, %v324
  %v341 = vsub.f32 %v277, %v325
  %v342 = vsub.f32 %v278, %v326
  %v343 = vsub.f32 %v279, %v327
  %v344 = vsub.f32 %v280, %v328
  %v345 = vsub.f32 %v281, %v329
  %v346 = vsub.f32 %v282, %v330
  %v347 = vsub.f32 %v283, %v331
  %v348 = vsub.f32 %v284, %v332
  %v349 = vsub.f32 %v285, %v333
  %v350 = vsub.f32 %v286, %v334
  %v351 = vmul.f32 %v335, 1.442695
  %v352 = vpow.pop %v351
  %v353 = vmul.f32 %v336, 1.442695
  %v354 = vpow.pop %v353
  %v355 = vmul.f32 %v337, 1.442695
  %v356 = vpow.pop %v355
  %v357 = vmul.f32 %v338, 1.442695
  %v358 = vpow.pop %v357
  %v359 = vmul.f32 %v339, 1.442695
  %v360 = vpow.pop %v359
  %v361 = vmul.f32 %v340, 1.442695
  %v362 = vpow.pop %v361
  %v363 = vmul.f32 %v341, 1.442695
  %v364 = vpow.pop %v363
  %v365 = vmul.f32 %v342, 1.442695
  %v366 = vpow.pop %v365
  %v367 = vmul.f32 %v343, 1.442695
  %v368 = vpow.pop %v367
  %v369 = vmul.f32 %v344, 1.442695
  %v370 = vpow.pop %v369
  %v371 = vmul.f32 %v345, 1.442695
  %v372 = vpow.pop %v371
  %v373 = vmul.f32 %v346, 1.442695
  %v374 = vpow.pop %v373
  %v375 = vmul.f32 %v347, 1.442695
  %v376 = vpow.pop %v375
  %v377 = vmul.f32 %v348, 1.442695
  %v378 = vpow.pop %v377
  %v379 = vmul.f32 %v349, 1.442695
  %v380 = vpow.pop %v379
  %v381 = vmul.f32 %v350, 1.442695
  %v382 = vpow.pop %v381
  %384 = vset.pattern.permute.xlu0 0
  %385 = vperm.xlu0 %384, %v319
  %v386 = vpop.permute.xlu0 %385
  %389 = vset.pattern.permute.xlu0 0
  %390 = vperm.xlu0 %389, %v320
  %v391 = vpop.permute.xlu0 %390
  %394 = vset.pattern.permute.xlu0 0
  %395 = vperm.xlu0 %394, %v321
  %v396 = vpop.permute.xlu0 %395
  %399 = vset.pattern.permute.xlu0 0
  %400 = vperm.xlu0 %399, %v322
  %v401 = vpop.permute.xlu0 %400
  %404 = vset.pattern.permute.xlu0 0
  %405 = vperm.xlu0 %404, %v323
  %v406 = vpop.permute.xlu0 %405
  %409 = vset.pattern.permute.xlu0 0
  %410 = vperm.xlu0 %409, %v324
  %v411 = vpop.permute.xlu0 %410
  %414 = vset.pattern.permute.xlu0 0
  %415 = vperm.xlu0 %414, %v325
  %v416 = vpop.permute.xlu0 %415
  %419 = vset.pattern.permute.xlu0 0
  %420 = vperm.xlu0 %419, %v326
  %v421 = vpop.permute.xlu0 %420
  %424 = vset.pattern.permute.xlu0 0
  %425 = vperm.xlu0 %424, %v327
  %v426 = vpop.permute.xlu0 %425
  %429 = vset.pattern.permute.xlu0 0
  %430 = vperm.xlu0 %429, %v328
  %v431 = vpop.permute.xlu0 %430
  %434 = vset.pattern.permute.xlu0 0
  %435 = vperm.xlu0 %434, %v329
  %v436 = vpop.permute.xlu0 %435
  %439 = vset.pattern.permute.xlu0 0
  %440 = vperm.xlu0 %439, %v330
  %v441 = vpop.permute.xlu0 %440
  %444 = vset.pattern.permute.xlu0 0
  %445 = vperm.xlu0 %444, %v331
  %v446 = vpop.permute.xlu0 %445
  %449 = vset.pattern.permute.xlu0 0
  %450 = vperm.xlu0 %449, %v332
  %v451 = vpop.permute.xlu0 %450
  %454 = vset.pattern.permute.xlu0 0
  %455 = vperm.xlu0 %454, %v333
  %v456 = vpop.permute.xlu0 %455
  %459 = vset.pattern.permute.xlu0 0
  %460 = vperm.xlu0 %459, %v334
  %v461 = vpop.permute.xlu0 %460
  %v463 = vsub.f32 %v173, %v386
  %v464 = vsub.f32 %v174, %v391
  %v465 = vsub.f32 %v175, %v396
  %v466 = vsub.f32 %v176, %v401
  %v467 = vsub.f32 %v177, %v406
  %v468 = vsub.f32 %v178, %v411
  %v469 = vsub.f32 %v179, %v416
  %v470 = vsub.f32 %v180, %v421
  %v471 = vsub.f32 %v181, %v426
  %v472 = vsub.f32 %v182, %v431
  %v473 = vsub.f32 %v183, %v436
  %v474 = vsub.f32 %v184, %v441
  %v475 = vsub.f32 %v185, %v446
  %v476 = vsub.f32 %v186, %v451
  %v477 = vsub.f32 %v187, %v456
  %v478 = vsub.f32 %v188, %v461
  %v479 = vmul.f32 %v463, 1.442695
  %v480 = vpow.pop %v479
  %v481 = vmul.f32 %v464, 1.442695
  %v482 = vpow.pop %v481
  %v483 = vmul.f32 %v465, 1.442695
  %v484 = vpow.pop %v483
  %v485 = vmul.f32 %v466, 1.442695
  %v486 = vpow.pop %v485
  %v487 = vmul.f32 %v467, 1.442695
  %v488 = vpow.pop %v487
  %v489 = vmul.f32 %v468, 1.442695
  %v490 = vpow.pop %v489
  %v491 = vmul.f32 %v469, 1.442695
  %v492 = vpow.pop %v491
  %v493 = vmul.f32 %v470, 1.442695
  %v494 = vpow.pop %v493
  %v495 = vmul.f32 %v471, 1.442695
  %v496 = vpow.pop %v495
  %v497 = vmul.f32 %v472, 1.442695
  %v498 = vpow.pop %v497
  %v499 = vmul.f32 %v473, 1.442695
  %v500 = vpow.pop %v499
  %v501 = vmul.f32 %v474, 1.442695
  %v502 = vpow.pop %v501
  %v503 = vmul.f32 %v475, 1.442695
  %v504 = vpow.pop %v503
  %v505 = vmul.f32 %v476, 1.442695
  %v506 = vpow.pop %v505
  %v507 = vmul.f32 %v477, 1.442695
  %v508 = vpow.pop %v507
  %v509 = vmul.f32 %v478, 1.442695
  %v510 = vpow.pop %v509
  %s511 = smul.u32 0, 128
  %v512 = vlaneseq
  %v513 = vand.u32 %v512, 127
  %v514 = vstv %s511
  %v515 = vadd.s32 %v514, %v513
  %vm516 = vcmp.lt.s32.totalorder %v515, 16
  %v517 = vsel %vm516, 1, 0
  %vm518 = vcmp.eq.s32.totalorder %v517, 1
  %v519 = vsel %vm518, %v480, 0.0
  %v520 = vsel %vm518, %v482, 0.0
  %v521 = vsel %vm518, %v484, 0.0
  %v522 = vsel %vm518, %v486, 0.0
  %v523 = vsel %vm518, %v488, 0.0
  %v524 = vsel %vm518, %v490, 0.0
  %v525 = vsel %vm518, %v492, 0.0
  %v526 = vsel %vm518, %v494, 0.0
  %v527 = vsel %vm518, %v496, 0.0
  %v528 = vsel %vm518, %v498, 0.0
  %v529 = vsel %vm518, %v500, 0.0
  %v530 = vsel %vm518, %v502, 0.0
  %v531 = vsel %vm518, %v504, 0.0
  %v532 = vsel %vm518, %v506, 0.0
  %v533 = vsel %vm518, %v508, 0.0
  %v534 = vsel %vm518, %v510, 0.0
  %535 = vadd.xlane.f32.xlu0 %v519
  %v536 = vpop.xlane.xlu0 %535
  %537 = vadd.xlane.f32.xlu0 %v520
  %v538 = vpop.xlane.xlu0 %537
  %539 = vadd.xlane.f32.xlu0 %v521
  %v540 = vpop.xlane.xlu0 %539
  %541 = vadd.xlane.f32.xlu0 %v522
  %v542 = vpop.xlane.xlu0 %541
  %543 = vadd.xlane.f32.xlu0 %v523
  %v544 = vpop.xlane.xlu0 %543
  %545 = vadd.xlane.f32.xlu0 %v524
  %v546 = vpop.xlane.xlu0 %545
  %547 = vadd.xlane.f32.xlu0 %v525
  %v548 = vpop.xlane.xlu0 %547
  %549 = vadd.xlane.f32.xlu0 %v526
  %v550 = vpop.xlane.xlu0 %549
  %551 = vadd.xlane.f32.xlu0 %v527
  %v552 = vpop.xlane.xlu0 %551
  %553 = vadd.xlane.f32.xlu0 %v528
  %v554 = vpop.xlane.xlu0 %553
  %555 = vadd.xlane.f32.xlu0 %v529
  %v556 = vpop.xlane.xlu0 %555
  %557 = vadd.xlane.f32.xlu0 %v530
  %v558 = vpop.xlane.xlu0 %557
  %559 = vadd.xlane.f32.xlu0 %v531
  %v560 = vpop.xlane.xlu0 %559
  %561 = vadd.xlane.f32.xlu0 %v532
  %v562 = vpop.xlane.xlu0 %561
  %563 = vadd.xlane.f32.xlu0 %v533
  %v564 = vpop.xlane.xlu0 %563
  %565 = vadd.xlane.f32.xlu0 %v534
  %v566 = vpop.xlane.xlu0 %565
  %s567 = smul.u32 0, 128
  %v568 = vlaneseq
  %v569 = vshrl.u32 %v568, 7
  %v570 = vadd.s32 %v569, 8
  %v571 = vadd.s32 %v569, 16
  %v572 = vadd.s32 %v569, 24
  %v573 = vadd.s32 %v569, 32
  %v574 = vadd.s32 %v569, 40
  %v575 = vadd.s32 %v569, 48
  %v576 = vadd.s32 %v569, 56
  %v577 = vadd.s32 %v569, 64
  %v578 = vadd.s32 %v569, 72
  %v579 = vadd.s32 %v569, 80
  %v580 = vadd.s32 %v569, 88
  %v581 = vadd.s32 %v569, 96
  %v582 = vadd.s32 %v569, 104
  %v583 = vadd.s32 %v569, 112
  %v584 = vadd.s32 %v569, 120
  %v585 = vstv %s567
  %v586 = vadd.s32 %v585, %v569
  %v587 = vadd.s32 %v585, %v570
  %v588 = vadd.s32 %v585, %v571
  %v589 = vadd.s32 %v585, %v572
  %v590 = vadd.s32 %v585, %v573
  %v591 = vadd.s32 %v585, %v574
  %v592 = vadd.s32 %v585, %v575
  %v593 = vadd.s32 %v585, %v576
  %v594 = vadd.s32 %v585, %v577
  %v595 = vadd.s32 %v585, %v578
  %v596 = vadd.s32 %v585, %v579
  %v597 = vadd.s32 %v585, %v580
  %v598 = vadd.s32 %v585, %v581
  %v599 = vadd.s32 %v585, %v582
  %v600 = vadd.s32 %v585, %v583
  %v601 = vadd.s32 %v585, %v584
  %vm602 = vcmp.ge.s32.totalorder %v586, %v514
  %vm603 = vcmp.ge.s32.totalorder %v587, %v514
  %vm604 = vcmp.ge.s32.totalorder %v588, %v514
  %vm605 = vcmp.ge.s32.totalorder %v589, %v514
  %vm606 = vcmp.ge.s32.totalorder %v590, %v514
  %vm607 = vcmp.ge.s32.totalorder %v591, %v514
  %vm608 = vcmp.ge.s32.totalorder %v592, %v514
  %vm609 = vcmp.ge.s32.totalorder %v593, %v514
  %vm610 = vcmp.ge.s32.totalorder %v594, %v514
  %vm611 = vcmp.ge.s32.totalorder %v595, %v514
  %vm612 = vcmp.ge.s32.totalorder %v596, %v514
  %vm613 = vcmp.ge.s32.totalorder %v597, %v514
  %vm614 = vcmp.ge.s32.totalorder %v598, %v514
  %vm615 = vcmp.ge.s32.totalorder %v599, %v514
  %vm616 = vcmp.ge.s32.totalorder %v600, %v514
  %vm617 = vcmp.ge.s32.totalorder %v601, %v514
  %s618 = sadd.s32 0, 1
  %s619 = smul.u32 %s618, 128
  %v620 = vstv %s619
  %vm621 = vcmp.lt.s32.totalorder %v586, %v620
  %vm622 = vcmp.lt.s32.totalorder %v587, %v620
  %vm623 = vcmp.lt.s32.totalorder %v588, %v620
  %vm624 = vcmp.lt.s32.totalorder %v589, %v620
  %vm625 = vcmp.lt.s32.totalorder %v590, %v620
  %vm626 = vcmp.lt.s32.totalorder %v591, %v620
  %vm627 = vcmp.lt.s32.totalorder %v592, %v620
  %vm628 = vcmp.lt.s32.totalorder %v593, %v620
  %vm629 = vcmp.lt.s32.totalorder %v594, %v620
  %vm630 = vcmp.lt.s32.totalorder %v595, %v620
  %vm631 = vcmp.lt.s32.totalorder %v596, %v620
  %vm632 = vcmp.lt.s32.totalorder %v597, %v620
  %vm633 = vcmp.lt.s32.totalorder %v598, %v620
  %vm634 = vcmp.lt.s32.totalorder %v599, %v620
  %vm635 = vcmp.lt.s32.totalorder %v600, %v620
  %vm636 = vcmp.lt.s32.totalorder %v601, %v620
  %vm637 = vmand %vm602, %vm621
  %vm638 = vmand %vm603, %vm622
  %vm639 = vmand %vm604, %vm623
  %vm640 = vmand %vm605, %vm624
  %vm641 = vmand %vm606, %vm625
  %vm642 = vmand %vm607, %vm626
  %vm643 = vmand %vm608, %vm627
  %vm644 = vmand %vm609, %vm628
  %vm645 = vmand %vm610, %vm629
  %vm646 = vmand %vm611, %vm630
  %vm647 = vmand %vm612, %vm631
  %vm648 = vmand %vm613, %vm632
  %vm649 = vmand %vm614, %vm633
  %vm650 = vmand %vm615, %vm634
  %vm651 = vmand %vm616, %vm635
  %vm652 = vmand %vm617, %vm636
  %v653 = vld [vmem:[%s3] sm:$0xff]
  %v654 = vld [vmem:[%s3 + $0x8] sm:$0xff]
  %v655 = vld [vmem:[%s3 + $0x10] sm:$0xff]
  %v656 = vld [vmem:[%s3 + $0x18] sm:$0xff]
  %v657 = vld [vmem:[%s3 + $0x20] sm:$0xff]
  %v658 = vld [vmem:[%s3 + $0x28] sm:$0xff]
  %v659 = vld [vmem:[%s3 + $0x30] sm:$0xff]
  %v660 = vld [vmem:[%s3 + $0x38] sm:$0xff]
  %v661 = vld [vmem:[%s3 + $0x40] sm:$0xff]
  %v662 = vld [vmem:[%s3 + $0x48] sm:$0xff]
  %v663 = vld [vmem:[%s3 + $0x50] sm:$0xff]
  %v664 = vld [vmem:[%s3 + $0x58] sm:$0xff]
  %v665 = vld [vmem:[%s3 + $0x60] sm:$0xff]
  %v666 = vld [vmem:[%s3 + $0x68] sm:$0xff]
  %v667 = vld [vmem:[%s3 + $0x70] sm:$0xff]
  %v668 = vld [vmem:[%s3 + $0x78] sm:$0xff]
  %v669 = vsub.f32 %v653, %v319
  %v670 = vsub.f32 %v654, %v320
  %v671 = vsub.f32 %v655, %v321
  %v672 = vsub.f32 %v656, %v322
  %v673 = vsub.f32 %v657, %v323
  %v674 = vsub.f32 %v658, %v324
  %v675 = vsub.f32 %v659, %v325
  %v676 = vsub.f32 %v660, %v326
  %v677 = vsub.f32 %v661, %v327
  %v678 = vsub.f32 %v662, %v328
  %v679 = vsub.f32 %v663, %v329
  %v680 = vsub.f32 %v664, %v330
  %v681 = vsub.f32 %v665, %v331
  %v682 = vsub.f32 %v666, %v332
  %v683 = vsub.f32 %v667, %v333
  %v684 = vsub.f32 %v668, %v334
  %v685 = vmul.f32 %v669, 1.442695
  %v686 = vpow.pop %v685
  %v687 = vmul.f32 %v670, 1.442695
  %v688 = vpow.pop %v687
  %v689 = vmul.f32 %v671, 1.442695
  %v690 = vpow.pop %v689
  %v691 = vmul.f32 %v672, 1.442695
  %v692 = vpow.pop %v691
  %v693 = vmul.f32 %v673, 1.442695
  %v694 = vpow.pop %v693
  %v695 = vmul.f32 %v674, 1.442695
  %v696 = vpow.pop %v695
  %v697 = vmul.f32 %v675, 1.442695
  %v698 = vpow.pop %v697
  %v699 = vmul.f32 %v676, 1.442695
  %v700 = vpow.pop %v699
  %v701 = vmul.f32 %v677, 1.442695
  %v702 = vpow.pop %v701
  %v703 = vmul.f32 %v678, 1.442695
  %v704 = vpow.pop %v703
  %v705 = vmul.f32 %v679, 1.442695
  %v706 = vpow.pop %v705
  %v707 = vmul.f32 %v680, 1.442695
  %v708 = vpow.pop %v707
  %v709 = vmul.f32 %v681, 1.442695
  %v710 = vpow.pop %v709
  %v711 = vmul.f32 %v682, 1.442695
  %v712 = vpow.pop %v711
  %v713 = vmul.f32 %v683, 1.442695
  %v714 = vpow.pop %v713
  %v715 = vmul.f32 %v684, 1.442695
  %v716 = vpow.pop %v715
  %v717 = vsel %vm637, %v686, 0.0
  %v718 = vsel %vm638, %v688, 0.0
  %v719 = vsel %vm639, %v690, 0.0
  %v720 = vsel %vm640, %v692, 0.0
  %v721 = vsel %vm641, %v694, 0.0
  %v722 = vsel %vm642, %v696, 0.0
  %v723 = vsel %vm643, %v698, 0.0
  %v724 = vsel %vm644, %v700, 0.0
  %v725 = vsel %vm645, %v702, 0.0
  %v726 = vsel %vm646, %v704, 0.0
  %v727 = vsel %vm647, %v706, 0.0
  %v728 = vsel %vm648, %v708, 0.0
  %v729 = vsel %vm649, %v710, 0.0
  %v730 = vsel %vm650, %v712, 0.0
  %v731 = vsel %vm651, %v714, 0.0
  %v732 = vsel %vm652, %v716, 0.0
  %v733 = vsub.f32 %v536, %v717
  %v734 = vsub.f32 %v538, %v718
  %v735 = vsub.f32 %v540, %v719
  %v736 = vsub.f32 %v542, %v720
  %v737 = vsub.f32 %v544, %v721
  %v738 = vsub.f32 %v546, %v722
  %v739 = vsub.f32 %v548, %v723
  %v740 = vsub.f32 %v550, %v724
  %v741 = vsub.f32 %v552, %v725
  %v742 = vsub.f32 %v554, %v726
  %v743 = vsub.f32 %v556, %v727
  %v744 = vsub.f32 %v558, %v728
  %v745 = vsub.f32 %v560, %v729
  %v746 = vsub.f32 %v562, %v730
  %v747 = vsub.f32 %v564, %v731
  %v748 = vsub.f32 %v566, %v732
  %v749 = vld [vmem:[#allocation3] sm:$0xff]
  %v750 = vld [vmem:[#allocation3 + $0x8] sm:$0xff]
  %v751 = vld [vmem:[#allocation3 + $0x10] sm:$0xff]
  %v752 = vld [vmem:[#allocation3 + $0x18] sm:$0xff]
  %v753 = vld [vmem:[#allocation3 + $0x20] sm:$0xff]
  %v754 = vld [vmem:[#allocation3 + $0x28] sm:$0xff]
  %v755 = vld [vmem:[#allocation3 + $0x30] sm:$0xff]
  %v756 = vld [vmem:[#allocation3 + $0x38] sm:$0xff]
  %v757 = vld [vmem:[#allocation3 + $0x40] sm:$0xff]
  %v758 = vld [vmem:[#allocation3 + $0x48] sm:$0xff]
  %v759 = vld [vmem:[#allocation3 + $0x50] sm:$0xff]
  %v760 = vld [vmem:[#allocation3 + $0x58] sm:$0xff]
  %v761 = vld [vmem:[#allocation3 + $0x60] sm:$0xff]
  %v762 = vld [vmem:[#allocation3 + $0x68] sm:$0xff]
  %v763 = vld [vmem:[#allocation3 + $0x70] sm:$0xff]
  %v764 = vld [vmem:[#allocation3 + $0x78] sm:$0xff]
  %v765 = vmul.f32 %v352, %v749
  %v766 = vmul.f32 %v354, %v750
  %v767 = vmul.f32 %v356, %v751
  %v768 = vmul.f32 %v358, %v752
  %v769 = vmul.f32 %v360, %v753
  %v770 = vmul.f32 %v362, %v754
  %v771 = vmul.f32 %v364, %v755
  %v772 = vmul.f32 %v366, %v756
  %v773 = vmul.f32 %v368, %v757
  %v774 = vmul.f32 %v370, %v758
  %v775 = vmul.f32 %v372, %v759
  %v776 = vmul.f32 %v374, %v760
  %v777 = vmul.f32 %v376, %v761
  %v778 = vmul.f32 %v378, %v762
  %v779 = vmul.f32 %v380, %v763
  %v780 = vmul.f32 %v382, %v764
  %v781 = vadd.f32 %v765, %v733
  %v782 = vadd.f32 %v766, %v734
  %v783 = vadd.f32 %v767, %v735
  %v784 = vadd.f32 %v768, %v736
  %v785 = vadd.f32 %v769, %v737
  %v786 = vadd.f32 %v770, %v738
  %v787 = vadd.f32 %v771, %v739
  %v788 = vadd.f32 %v772, %v740
  %v789 = vadd.f32 %v773, %v741
  %v790 = vadd.f32 %v774, %v742
  %v791 = vadd.f32 %v775, %v743
  %v792 = vadd.f32 %v776, %v744
  %v793 = vadd.f32 %v777, %v745
  %v794 = vadd.f32 %v778, %v746
  %v795 = vadd.f32 %v779, %v747
  %v796 = vadd.f32 %v780, %v748
  %vm797 = vcmask 7168
  %798 = vst.msk [vmem:[#allocation3] sm:$0xff] %vm797, %v781
  %799 = vst.msk [vmem:[#allocation3 + $0x8] sm:$0xff] %vm797, %v782
  %800 = vst.msk [vmem:[#allocation3 + $0x10] sm:$0xff] %vm797, %v783
  %801 = vst.msk [vmem:[#allocation3 + $0x18] sm:$0xff] %vm797, %v784
  %802 = vst.msk [vmem:[#allocation3 + $0x20] sm:$0xff] %vm797, %v785
  %803 = vst.msk [vmem:[#allocation3 + $0x28] sm:$0xff] %vm797, %v786
  %804 = vst.msk [vmem:[#allocation3 + $0x30] sm:$0xff] %vm797, %v787
  %805 = vst.msk [vmem:[#allocation3 + $0x38] sm:$0xff] %vm797, %v788
  %806 = vst.msk [vmem:[#allocation3 + $0x40] sm:$0xff] %vm797, %v789
  %807 = vst.msk [vmem:[#allocation3 + $0x48] sm:$0xff] %vm797, %v790
  %808 = vst.msk [vmem:[#allocation3 + $0x50] sm:$0xff] %vm797, %v791
  %809 = vst.msk [vmem:[#allocation3 + $0x58] sm:$0xff] %vm797, %v792
  %810 = vst.msk [vmem:[#allocation3 + $0x60] sm:$0xff] %vm797, %v793
  %811 = vst.msk [vmem:[#allocation3 + $0x68] sm:$0xff] %vm797, %v794
  %812 = vst.msk [vmem:[#allocation3 + $0x70] sm:$0xff] %vm797, %v795
  %813 = vst.msk [vmem:[#allocation3 + $0x78] sm:$0xff] %vm797, %v796
  %814 = vst.msk [vmem:[#allocation2] sm:$0xff] %vm797, %v319
  %815 = vst.msk [vmem:[#allocation2 + $0x8] sm:$0xff] %vm797, %v320
  %816 = vst.msk [vmem:[#allocation2 + $0x10] sm:$0xff] %vm797, %v321
  %817 = vst.msk [vmem:[#allocation2 + $0x18] sm:$0xff] %vm797, %v322
  %818 = vst.msk [vmem:[#allocation2 + $0x20] sm:$0xff] %vm797, %v323
  %819 = vst.msk [vmem:[#allocation2 + $0x28] sm:$0xff] %vm797, %v324
  %820 = vst.msk [vmem:[#allocation2 + $0x30] sm:$0xff] %vm797, %v325
  %821 = vst.msk [vmem:[#allocation2 + $0x38] sm:$0xff] %vm797, %v326
  %822 = vst.msk [vmem:[#allocation2 + $0x40] sm:$0xff] %vm797, %v327
  %823 = vst.msk [vmem:[#allocation2 + $0x48] sm:$0xff] %vm797, %v328
  %824 = vst.msk [vmem:[#allocation2 + $0x50] sm:$0xff] %vm797, %v329
  %825 = vst.msk [vmem:[#allocation2 + $0x58] sm:$0xff] %vm797, %v330
  %826 = vst.msk [vmem:[#allocation2 + $0x60] sm:$0xff] %vm797, %v331
  %827 = vst.msk [vmem:[#allocation2 + $0x68] sm:$0xff] %vm797, %v332
  %828 = vst.msk [vmem:[#allocation2 + $0x70] sm:$0xff] %vm797, %v333
  %829 = vst.msk [vmem:[#allocation2 + $0x78] sm:$0xff] %vm797, %v334
  %v830 = vld [vmem:[#allocation4] sm:$0xff]
  %v831 = vld [vmem:[#allocation4 + $0x8] sm:$0xff]
  %v832 = vld [vmem:[#allocation4 + $0x10] sm:$0xff]
  %v833 = vld [vmem:[#allocation4 + $0x18] sm:$0xff]
  %v834 = vld [vmem:[#allocation4 + $0x20] sm:$0xff]
  %v835 = vld [vmem:[#allocation4 + $0x28] sm:$0xff]
  %v836 = vld [vmem:[#allocation4 + $0x30] sm:$0xff]
  %v837 = vld [vmem:[#allocation4 + $0x38] sm:$0xff]
  %v838 = vld [vmem:[#allocation4 + $0x40] sm:$0xff]
  %v839 = vld [vmem:[#allocation4 + $0x48] sm:$0xff]
  %v840 = vld [vmem:[#allocation4 + $0x50] sm:$0xff]
  %v841 = vld [vmem:[#allocation4 + $0x58] sm:$0xff]
  %v842 = vld [vmem:[#allocation4 + $0x60] sm:$0xff]
  %v843 = vld [vmem:[#allocation4 + $0x68] sm:$0xff]
  %v844 = vld [vmem:[#allocation4 + $0x70] sm:$0xff]
  %v845 = vld [vmem:[#allocation4 + $0x78] sm:$0xff]
  %v846 = vsel %vm255, %v173, 0.0
  %v847 = vsel %vm256, %v174, 0.0
  %v848 = vsel %vm257, %v175, 0.0
  %v849 = vsel %vm258, %v176, 0.0
  %v850 = vsel %vm259, %v177, 0.0
  %v851 = vsel %vm260, %v178, 0.0
  %v852 = vsel %vm261, %v179, 0.0
  %v853 = vsel %vm262, %v180, 0.0
  %v854 = vsel %vm263, %v181, 0.0
  %v855 = vsel %vm264, %v182, 0.0
  %v856 = vsel %vm265, %v183, 0.0
  %v857 = vsel %vm266, %v184, 0.0
  %v858 = vsel %vm267, %v185, 0.0
  %v859 = vsel %vm268, %v186, 0.0
  %v860 = vsel %vm269, %v187, 0.0
  %v861 = vsel %vm270, %v188, 0.0
  %862 = vadd.xlane.f32.xlu0 %v846
  %v863 = vpop.xlane.xlu0 %862
  %864 = vadd.xlane.f32.xlu0 %v847
  %v865 = vpop.xlane.xlu0 %864
  %866 = vadd.xlane.f32.xlu0 %v848
  %v867 = vpop.xlane.xlu0 %866
  %868 = vadd.xlane.f32.xlu0 %v849
  %v869 = vpop.xlane.xlu0 %868
  %870 = vadd.xlane.f32.xlu0 %v850
  %v871 = vpop.xlane.xlu0 %870
  %872 = vadd.xlane.f32.xlu0 %v851
  %v873 = vpop.xlane.xlu0 %872
  %874 = vadd.xlane.f32.xlu0 %v852
  %v875 = vpop.xlane.xlu0 %874
  %876 = vadd.xlane.f32.xlu0 %v853
  %v877 = vpop.xlane.xlu0 %876
  %878 = vadd.xlane.f32.xlu0 %v854
  %v879 = vpop.xlane.xlu0 %878
  %880 = vadd.xlane.f32.xlu0 %v855
  %v881 = vpop.xlane.xlu0 %880
  %882 = vadd.xlane.f32.xlu0 %v856
  %v883 = vpop.xlane.xlu0 %882
  %884 = vadd.xlane.f32.xlu0 %v857
  %v885 = vpop.xlane.xlu0 %884
  %886 = vadd.xlane.f32.xlu0 %v858
  %v887 = vpop.xlane.xlu0 %886
  %888 = vadd.xlane.f32.xlu0 %v859
  %v889 = vpop.xlane.xlu0 %888
  %890 = vadd.xlane.f32.xlu0 %v860
  %v891 = vpop.xlane.xlu0 %890
  %892 = vadd.xlane.f32.xlu0 %v861
  %v893 = vpop.xlane.xlu0 %892
  %v894 = vadd.f32 %v830, %v863
  %v895 = vadd.f32 %v831, %v865
  %v896 = vadd.f32 %v832, %v867
  %v897 = vadd.f32 %v833, %v869
  %v898 = vadd.f32 %v834, %v871
  %v899 = vadd.f32 %v835, %v873
  %v900 = vadd.f32 %v836, %v875
  %v901 = vadd.f32 %v837, %v877
  %v902 = vadd.f32 %v838, %v879
  %v903 = vadd.f32 %v839, %v881
  %v904 = vadd.f32 %v840, %v883
  %v905 = vadd.f32 %v841, %v885
  %v906 = vadd.f32 %v842, %v887
  %v907 = vadd.f32 %v843, %v889
  %v908 = vadd.f32 %v844, %v891
  %v909 = vadd.f32 %v845, %v893
  %910 = vst.msk [vmem:[#allocation4] sm:$0xff] %vm797, %v894
  %911 = vst.msk [vmem:[#allocation4 + $0x8] sm:$0xff] %vm797, %v895
  %912 = vst.msk [vmem:[#allocation4 + $0x10] sm:$0xff] %vm797, %v896
  %913 = vst.msk [vmem:[#allocation4 + $0x18] sm:$0xff] %vm797, %v897
  %914 = vst.msk [vmem:[#allocation4 + $0x20] sm:$0xff] %vm797, %v898
  %915 = vst.msk [vmem:[#allocation4 + $0x28] sm:$0xff] %vm797, %v899
  %916 = vst.msk [vmem:[#allocation4 + $0x30] sm:$0xff] %vm797, %v900
  %917 = vst.msk [vmem:[#allocation4 + $0x38] sm:$0xff] %vm797, %v901
  %918 = vst.msk [vmem:[#allocation4 + $0x40] sm:$0xff] %vm797, %v902
  %919 = vst.msk [vmem:[#allocation4 + $0x48] sm:$0xff] %vm797, %v903
  %920 = vst.msk [vmem:[#allocation4 + $0x50] sm:$0xff] %vm797, %v904
  %921 = vst.msk [vmem:[#allocation4 + $0x58] sm:$0xff] %vm797, %v905
  %922 = vst.msk [vmem:[#allocation4 + $0x60] sm:$0xff] %vm797, %v906
  %923 = vst.msk [vmem:[#allocation4 + $0x68] sm:$0xff] %vm797, %v907
  %924 = vst.msk [vmem:[#allocation4 + $0x70] sm:$0xff] %vm797, %v908
  %925 = vst.msk [vmem:[#allocation4 + $0x78] sm:$0xff] %vm797, %v909
  // Predicated region
  $region30: #{tpu_custom_call.1} parent=0 // pred_check
    %p926 = pneg %p23
  $region31: #{tpu_custom_call.1} parent=0 // pred_check_branch
    %928 = sbr.rel (%p926) target = $region33
  $region32: #{tpu_custom_call.1} parent=0 // pred_region
    %v929 = vld [vmem:[#allocation3] sm:$0xff]
    %v930 = vld [vmem:[#allocation3 + $0x8] sm:$0xff]
    %v931 = vld [vmem:[#allocation3 + $0x10] sm:$0xff]
    %v932 = vld [vmem:[#allocation3 + $0x18] sm:$0xff]
    %v933 = vld [vmem:[#allocation3 + $0x20] sm:$0xff]
    %v934 = vld [vmem:[#allocation3 + $0x28] sm:$0xff]
    %v935 = vld [vmem:[#allocation3 + $0x30] sm:$0xff]
    %v936 = vld [vmem:[#allocation3 + $0x38] sm:$0xff]
    %v937 = vld [vmem:[#allocation3 + $0x40] sm:$0xff]
    %v938 = vld [vmem:[#allocation3 + $0x48] sm:$0xff]
    %v939 = vld [vmem:[#allocation3 + $0x50] sm:$0xff]
    %v940 = vld [vmem:[#allocation3 + $0x58] sm:$0xff]
    %v941 = vld [vmem:[#allocation3 + $0x60] sm:$0xff]
    %v942 = vld [vmem:[#allocation3 + $0x68] sm:$0xff]
    %v943 = vld [vmem:[#allocation3 + $0x70] sm:$0xff]
    %v944 = vld [vmem:[#allocation3 + $0x78] sm:$0xff]
    %v945 = vmax.f32 %v929, 1e-37
    %v946 = vmax.f32 %v930, 1e-37
    %v947 = vmax.f32 %v931, 1e-37
    %v948 = vmax.f32 %v932, 1e-37
    %v949 = vmax.f32 %v933, 1e-37
    %v950 = vmax.f32 %v934, 1e-37
    %v951 = vmax.f32 %v935, 1e-37
    %v952 = vmax.f32 %v936, 1e-37
    %v953 = vmax.f32 %v937, 1e-37
    %v954 = vmax.f32 %v938, 1e-37
    %v955 = vmax.f32 %v939, 1e-37
    %v956 = vmax.f32 %v940, 1e-37
    %v957 = vmax.f32 %v941, 1e-37
    %v958 = vmax.f32 %v942, 1e-37
    %v959 = vmax.f32 %v943, 1e-37
    %v960 = vmax.f32 %v944, 1e-37
    %v961 = vld [vmem:[#allocation2] sm:$0xff]
    %v962 = vld [vmem:[#allocation2 + $0x8] sm:$0xff]
    %v963 = vld [vmem:[#allocation2 + $0x10] sm:$0xff]
    %v964 = vld [vmem:[#allocation2 + $0x18] sm:$0xff]
    %v965 = vld [vmem:[#allocation2 + $0x20] sm:$0xff]
    %v966 = vld [vmem:[#allocation2 + $0x28] sm:$0xff]
    %v967 = vld [vmem:[#allocation2 + $0x30] sm:$0xff]
    %v968 = vld [vmem:[#allocation2 + $0x38] sm:$0xff]
    %v969 = vld [vmem:[#allocation2 + $0x40] sm:$0xff]
    %v970 = vld [vmem:[#allocation2 + $0x48] sm:$0xff]
    %v971 = vld [vmem:[#allocation2 + $0x50] sm:$0xff]
    %v972 = vld [vmem:[#allocation2 + $0x58] sm:$0xff]
    %v973 = vld [vmem:[#allocation2 + $0x60] sm:$0xff]
    %v974 = vld [vmem:[#allocation2 + $0x68] sm:$0xff]
    %v975 = vld [vmem:[#allocation2 + $0x70] sm:$0xff]
    %v976 = vld [vmem:[#allocation2 + $0x78] sm:$0xff]
    %v977 = vlog2.pop %v945
    %v978 = vmul.f32 %v977, 0.6931472
    %v979 = vlog2.pop %v946
    %v980 = vmul.f32 %v979, 0.6931472
    %v981 = vlog2.pop %v947
    %v982 = vmul.f32 %v981, 0.6931472
    %v983 = vlog2.pop %v948
    %v984 = vmul.f32 %v983, 0.6931472
    %v985 = vlog2.pop %v949
    %v986 = vmul.f32 %v985, 0.6931472
    %v987 = vlog2.pop %v950
    %v988 = vmul.f32 %v987, 0.6931472
    %v989 = vlog2.pop %v951
    %v990 = vmul.f32 %v989, 0.6931472
    %v991 = vlog2.pop %v952
    %v992 = vmul.f32 %v991, 0.6931472
    %v993 = vlog2.pop %v953
    %v994 = vmul.f32 %v993, 0.6931472
    %v995 = vlog2.pop %v954
    %v996 = vmul.f32 %v995, 0.6931472
    %v997 = vlog2.pop %v955
    %v998 = vmul.f32 %v997, 0.6931472
    %v999 = vlog2.pop %v956
    %v1000 = vmul.f32 %v999, 0.6931472
    %v1001 = vlog2.pop %v957
    %v1002 = vmul.f32 %v1001, 0.6931472
    %v1003 = vlog2.pop %v958
    %v1004 = vmul.f32 %v1003, 0.6931472
    %v1005 = vlog2.pop %v959
    %v1006 = vmul.f32 %v1005, 0.6931472
    %v1007 = vlog2.pop %v960
    %v1008 = vmul.f32 %v1007, 0.6931472
    %v1009 = vadd.f32 %v961, %v978
    %v1010 = vadd.f32 %v962, %v980
    %v1011 = vadd.f32 %v963, %v982
    %v1012 = vadd.f32 %v964, %v984
    %v1013 = vadd.f32 %v965, %v986
    %v1014 = vadd.f32 %v966, %v988
    %v1015 = vadd.f32 %v967, %v990
    %v1016 = vadd.f32 %v968, %v992
    %v1017 = vadd.f32 %v969, %v994
    %v1018 = vadd.f32 %v970, %v996
    %v1019 = vadd.f32 %v971, %v998
    %v1020 = vadd.f32 %v972, %v1000
    %v1021 = vadd.f32 %v973, %v1002
    %v1022 = vadd.f32 %v974, %v1004
    %v1023 = vadd.f32 %v975, %v1006
    %v1024 = vadd.f32 %v976, %v1008
    %v1025 = vld [vmem:[#allocation4] sm:$0xff]
    %v1026 = vld [vmem:[#allocation4 + $0x8] sm:$0xff]
    %v1027 = vld [vmem:[#allocation4 + $0x10] sm:$0xff]
    %v1028 = vld [vmem:[#allocation4 + $0x18] sm:$0xff]
    %v1029 = vld [vmem:[#allocation4 + $0x20] sm:$0xff]
    %v1030 = vld [vmem:[#allocation4 + $0x28] sm:$0xff]
    %v1031 = vld [vmem:[#allocation4 + $0x30] sm:$0xff]
    %v1032 = vld [vmem:[#allocation4 + $0x38] sm:$0xff]
    %v1033 = vld [vmem:[#allocation4 + $0x40] sm:$0xff]
    %v1034 = vld [vmem:[#allocation4 + $0x48] sm:$0xff]
    %v1035 = vld [vmem:[#allocation4 + $0x50] sm:$0xff]
    %v1036 = vld [vmem:[#allocation4 + $0x58] sm:$0xff]
    %v1037 = vld [vmem:[#allocation4 + $0x60] sm:$0xff]
    %v1038 = vld [vmem:[#allocation4 + $0x68] sm:$0xff]
    %v1039 = vld [vmem:[#allocation4 + $0x70] sm:$0xff]
    %v1040 = vld [vmem:[#allocation4 + $0x78] sm:$0xff]
    %v1041 = vld [vmem:[%s3] sm:$0xff]
    %v1042 = vld [vmem:[%s3 + $0x8] sm:$0xff]
    %v1043 = vld [vmem:[%s3 + $0x10] sm:$0xff]
    %v1044 = vld [vmem:[%s3 + $0x18] sm:$0xff]
    %v1045 = vld [vmem:[%s3 + $0x20] sm:$0xff]
    %v1046 = vld [vmem:[%s3 + $0x28] sm:$0xff]
    %v1047 = vld [vmem:[%s3 + $0x30] sm:$0xff]
    %v1048 = vld [vmem:[%s3 + $0x38] sm:$0xff]
    %v1049 = vld [vmem:[%s3 + $0x40] sm:$0xff]
    %v1050 = vld [vmem:[%s3 + $0x48] sm:$0xff]
    %v1051 = vld [vmem:[%s3 + $0x50] sm:$0xff]
    %v1052 = vld [vmem:[%s3 + $0x58] sm:$0xff]
    %v1053 = vld [vmem:[%s3 + $0x60] sm:$0xff]
    %v1054 = vld [vmem:[%s3 + $0x68] sm:$0xff]
    %v1055 = vld [vmem:[%s3 + $0x70] sm:$0xff]
    %v1056 = vld [vmem:[%s3 + $0x78] sm:$0xff]
    %v1057 = vsub.f32 %v1025, %v1041
    %v1058 = vsub.f32 %v1026, %v1042
    %v1059 = vsub.f32 %v1027, %v1043
    %v1060 = vsub.f32 %v1028, %v1044
    %v1061 = vsub.f32 %v1029, %v1045
    %v1062 = vsub.f32 %v1030, %v1046
    %v1063 = vsub.f32 %v1031, %v1047
    %v1064 = vsub.f32 %v1032, %v1048
    %v1065 = vsub.f32 %v1033, %v1049
    %v1066 = vsub.f32 %v1034, %v1050
    %v1067 = vsub.f32 %v1035, %v1051
    %v1068 = vsub.f32 %v1036, %v1052
    %v1069 = vsub.f32 %v1037, %v1053
    %v1070 = vsub.f32 %v1038, %v1054
    %v1071 = vsub.f32 %v1039, %v1055
    %v1072 = vsub.f32 %v1040, %v1056
    %v1073 = vld [vmem:[%s2] sm:$0xff]
    %v1074 = vld [vmem:[%s2 + $0x8] sm:$0xff]
    %v1075 = vld [vmem:[%s2 + $0x10] sm:$0xff]
    %v1076 = vld [vmem:[%s2 + $0x18] sm:$0xff]
    %v1077 = vld [vmem:[%s2 + $0x20] sm:$0xff]
    %v1078 = vld [vmem:[%s2 + $0x28] sm:$0xff]
    %v1079 = vld [vmem:[%s2 + $0x30] sm:$0xff]
    %v1080 = vld [vmem:[%s2 + $0x38] sm:$0xff]
    %v1081 = vld [vmem:[%s2 + $0x40] sm:$0xff]
    %v1082 = vld [vmem:[%s2 + $0x48] sm:$0xff]
    %v1083 = vld [vmem:[%s2 + $0x50] sm:$0xff]
    %v1084 = vld [vmem:[%s2 + $0x58] sm:$0xff]
    %v1085 = vld [vmem:[%s2 + $0x60] sm:$0xff]
    %v1086 = vld [vmem:[%s2 + $0x68] sm:$0xff]
    %v1087 = vld [vmem:[%s2 + $0x70] sm:$0xff]
    %v1088 = vld [vmem:[%s2 + $0x78] sm:$0xff]
    %v1089 = vmul.f32 %v1057, %v1073
    %v1090 = vmul.f32 %v1058, %v1074
    %v1091 = vmul.f32 %v1059, %v1075
    %v1092 = vmul.f32 %v1060, %v1076
    %v1093 = vmul.f32 %v1061, %v1077
    %v1094 = vmul.f32 %v1062, %v1078
    %v1095 = vmul.f32 %v1063, %v1079
    %v1096 = vmul.f32 %v1064, %v1080
    %v1097 = vmul.f32 %v1065, %v1081
    %v1098 = vmul.f32 %v1066, %v1082
    %v1099 = vmul.f32 %v1067, %v1083
    %v1100 = vmul.f32 %v1068, %v1084
    %v1101 = vmul.f32 %v1069, %v1085
    %v1102 = vmul.f32 %v1070, %v1086
    %v1103 = vmul.f32 %v1071, %v1087
    %v1104 = vmul.f32 %v1072, %v1088
    %v1105 = vsub.f32 %v1089, %v1009
    %v1106 = vsub.f32 %v1090, %v1010
    %v1107 = vsub.f32 %v1091, %v1011
    %v1108 = vsub.f32 %v1092, %v1012
    %v1109 = vsub.f32 %v1093, %v1013
    %v1110 = vsub.f32 %v1094, %v1014
    %v1111 = vsub.f32 %v1095, %v1015
    %v1112 = vsub.f32 %v1096, %v1016
    %v1113 = vsub.f32 %v1097, %v1017
    %v1114 = vsub.f32 %v1098, %v1018
    %v1115 = vsub.f32 %v1099, %v1019
    %v1116 = vsub.f32 %v1100, %v1020
    %v1117 = vsub.f32 %v1101, %v1021
    %v1118 = vsub.f32 %v1102, %v1022
    %v1119 = vsub.f32 %v1103, %v1023
    %v1120 = vsub.f32 %v1104, %v1024
    %v1121 = vmul.f32 %v1105, -1.4285715
    %v1122 = vmul.f32 %v1106, -1.4285715
    %v1123 = vmul.f32 %v1107, -1.4285715
    %v1124 = vmul.f32 %v1108, -1.4285715
    %v1125 = vmul.f32 %v1109, -1.4285715
    %v1126 = vmul.f32 %v1110, -1.4285715
    %v1127 = vmul.f32 %v1111, -1.4285715
    %v1128 = vmul.f32 %v1112, -1.4285715
    %v1129 = vmul.f32 %v1113, -1.4285715
    %v1130 = vmul.f32 %v1114, -1.4285715
    %v1131 = vmul.f32 %v1115, -1.4285715
    %v1132 = vmul.f32 %v1116, -1.4285715
    %v1133 = vmul.f32 %v1117, -1.4285715
    %v1134 = vmul.f32 %v1118, -1.4285715
    %v1135 = vmul.f32 %v1119, -1.4285715
    %v1136 = vmul.f32 %v1120, -1.4285715
    %vm1137 = vcmp.lt.s32.totalorder %v586, 16
    %vm1138 = vcmp.lt.s32.totalorder %v587, 16
    %vm1139 = vcmp.lt.s32.totalorder %v588, 16
    %vm1140 = vcmp.lt.s32.totalorder %v589, 16
    %vm1141 = vcmp.lt.s32.totalorder %v590, 16
    %vm1142 = vcmp.lt.s32.totalorder %v591, 16
    %vm1143 = vcmp.lt.s32.totalorder %v592, 16
    %vm1144 = vcmp.lt.s32.totalorder %v593, 16
    %vm1145 = vcmp.lt.s32.totalorder %v594, 16
    %vm1146 = vcmp.lt.s32.totalorder %v595, 16
    %vm1147 = vcmp.lt.s32.totalorder %v596, 16
    %vm1148 = vcmp.lt.s32.totalorder %v597, 16
    %vm1149 = vcmp.lt.s32.totalorder %v598, 16
    %vm1150 = vcmp.lt.s32.totalorder %v599, 16
    %vm1151 = vcmp.lt.s32.totalorder %v600, 16
    %vm1152 = vcmp.lt.s32.totalorder %v601, 16
    %v1153 = vsel %vm1137, %v1121, 0.0
    %v1154 = vsel %vm1138, %v1122, 0.0
    %v1155 = vsel %vm1139, %v1123, 0.0
    %v1156 = vsel %vm1140, %v1124, 0.0
    %v1157 = vsel %vm1141, %v1125, 0.0
    %v1158 = vsel %vm1142, %v1126, 0.0
    %v1159 = vsel %vm1143, %v1127, 0.0
    %v1160 = vsel %vm1144, %v1128, 0.0
    %v1161 = vsel %vm1145, %v1129, 0.0
    %v1162 = vsel %vm1146, %v1130, 0.0
    %v1163 = vsel %vm1147, %v1131, 0.0
    %v1164 = vsel %vm1148, %v1132, 0.0
    %v1165 = vsel %vm1149, %v1133, 0.0
    %v1166 = vsel %vm1150, %v1134, 0.0
    %v1167 = vsel %vm1151, %v1135, 0.0
    %v1168 = vsel %vm1152, %v1136, 0.0
    %1169 = vst.msk [vmem:[%s6] sm:$0xff] %vm797, %v1153
    %1170 = vst.msk [vmem:[%s6 + $0x8] sm:$0xff] %vm797, %v1154
    %1171 = vst.msk [vmem:[%s6 + $0x10] sm:$0xff] %vm797, %v1155
    %1172 = vst.msk [vmem:[%s6 + $0x18] sm:$0xff] %vm797, %v1156
    %1173 = vst.msk [vmem:[%s6 + $0x20] sm:$0xff] %vm797, %v1157
    %1174 = vst.msk [vmem:[%s6 + $0x28] sm:$0xff] %vm797, %v1158
    %1175 = vst.msk [vmem:[%s6 + $0x30] sm:$0xff] %vm797, %v1159
    %1176 = vst.msk [vmem:[%s6 + $0x38] sm:$0xff] %vm797, %v1160
    %1177 = vst.msk [vmem:[%s6 + $0x40] sm:$0xff] %vm797, %v1161
    %1178 = vst.msk [vmem:[%s6 + $0x48] sm:$0xff] %vm797, %v1162
    %1179 = vst.msk [vmem:[%s6 + $0x50] sm:$0xff] %vm797, %v1163
    %1180 = vst.msk [vmem:[%s6 + $0x58] sm:$0xff] %vm797, %v1164
    %1181 = vst.msk [vmem:[%s6 + $0x60] sm:$0xff] %vm797, %v1165
    %1182 = vst.msk [vmem:[%s6 + $0x68] sm:$0xff] %vm797, %v1166
    %1183 = vst.msk [vmem:[%s6 + $0x70] sm:$0xff] %vm797, %v1167
    %1184 = vst.msk [vmem:[%s6 + $0x78] sm:$0xff] %vm797, %v1168
  $region33: #{tpu_custom_call.1} parent=0 // pred_fallthru
    _
  // Predicated region
  $region34: #{tpu_custom_call.1} parent=0 // pred_check
    _
  $region35: #{tpu_custom_call.1} parent=0 // pred_check_branch
    %1186 = sbr.rel (0) target = $region37
  $region36: #{tpu_custom_call.1} parent=0 // pred_region
    _
  $region37: #{tpu_custom_call.1} parent=0 // pred_fallthru
    _
  // Predicated region
  $region38: #{tpu_custom_call.1} parent=0 // pred_check
    _
  $region39: #{tpu_custom_call.1} parent=0 // pred_check_branch
    %1188 = sbr.rel (0) target = $region41
  $region40: #{tpu_custom_call.1} parent=0 // pred_region
    _
  $region41: #{tpu_custom_call.1} parent=0 // pred_fallthru
    _

</llo_original>
